<compile_context>
chip_gen: v7x
topology: tpu7x:2x2x1
jax: 0.10.0
libtpu: 0.0.40
codegen_flags: <defaults>
</compile_context>

<pallas_src>
import jax
import jax.numpy as jnp
from jax.experimental import pallas as pl
from jax.experimental.pallas import tpu as pltpu

# ---- mini ViT config (scaled-down vit_base_patch16_224, num_classes=768) ----
IMG = 32            # image size      (vs 224)
PATCH = 16          # patch size      (same as vit_base_patch16)
C_IN = 3
EMBED = 32          # embed dim       (vs 768)
DEPTH = 2           # blocks          (vs 12)
HEADS = 2           # attention heads (vs 12)
HEAD_DIM = EMBED // HEADS
MLP_HIDDEN = 4 * EMBED
NUM_CLASSES = 48    # output embedding of ImageEncoder (vs 768)
N_PATCH = (IMG // PATCH) ** 2
SEQ = N_PATCH + 1   # + cls token
SEQ_PAD = 8         # sublane-aligned sequence length (pad 5 -> 8)
LN_EPS = 1e-6
SCALE = HEAD_DIM ** -0.5
PATCH_DIM = C_IN * PATCH * PATCH
B_BLK = 1           # batch rows per grid step (parallel axis -> megacore on v7x)
NEG_BIG = -1e30     # key-padding mask value (finite; avoids inf-inf NaNs)


# ----------------------------- kernel -----------------------------------------
def _ln(x, g, b):
    mu = jnp.mean(x, axis=-1, keepdims=True)
    xc = x - mu
    var = jnp.mean(xc * xc, axis=-1, keepdims=True)
    return xc * jax.lax.rsqrt(var + LN_EPS) * g + b


def fused_vit_kernel(patches_ref, pw_ref, pos_ref, vecs_ref,
                     wqkv_ref, bqkv_ref, wo_ref,
                     w1_ref, b1_ref, w2_ref,
                     normgb_ref, hw_ref, hb_ref,
                     o_ref):
    """Full ViT forward for one batch block (tokens stay resident the whole time)."""
    bf = jnp.bfloat16
    Bb = patches_ref.shape[0]
    rows = Bb * SEQ_PAD

    # ---- patch embed: Conv2d(k=16, stride=16) as one (rows, C*P*P)@(C*P*P, E) ----
    # patches_ref rows 0 and SEQ..SEQ_PAD-1 are zero; cls token, pos embed and
    # the conv bias are all folded into pos_ref (token-init) at pack time.
    pt = patches_ref[...].reshape(rows, PATCH_DIM)                     # bf16
    pe = jnp.dot(pt, pw_ref[...], preferred_element_type=jnp.float32)  # (rows, E) f32
    x = pe + jnp.broadcast_to(pos_ref[...], (Bb, SEQ_PAD, EMBED)).reshape(rows, EMBED)
    # TODO(synk): pos_drop / attn_drop / proj_drop are p=0 at timm defaults (identity here).

    # key-side padding mask (shared by all blocks / heads)
    key_pos = jax.lax.broadcasted_iota(jnp.int32, (1, 1, SEQ_PAD), 2)
    key_mask = jnp.where(key_pos < SEQ, 0.0, NEG_BIG).astype(jnp.float32)

    vecs = vecs_ref[...]                                               # (DEPTH, 6, E)

    for d in range(DEPTH):                     # static unroll, weights stay in VMEM
        ln1g, ln1b, bo = vecs[d, 0:1], vecs[d, 1:2], vecs[d, 2:3]
        ln2g, ln2b, b2 = vecs[d, 3:4], vecs[d, 4:5], vecs[d, 5:6]

        # ---------------- attention branch: x = x + Attn(LN1(x)) ----------------
        h = _ln(x, ln1g, ln1b)
        # one fused QKV matmul per block; softmax scale pre-folded into Q columns
        qkv = jnp.dot(h.astype(bf), wqkv_ref[d],
                      preferred_element_type=jnp.float32) + bqkv_ref[d]   # (rows, 3E)
        head_outs = []
        for hd in range(HEADS):                # cheap lane slices, no extra matmuls
            q = qkv[:, hd * HEAD_DIM:(hd + 1) * HEAD_DIM].reshape(Bb, SEQ_PAD, HEAD_DIM)
            k = qkv[:, EMBED + hd * HEAD_DIM:EMBED + (hd + 1) * HEAD_DIM].reshape(
                Bb, SEQ_PAD, HEAD_DIM)
            v = qkv[:, 2 * EMBED + hd * HEAD_DIM:2 * EMBED + (hd + 1) * HEAD_DIM].reshape(
                Bb, SEQ_PAD, HEAD_DIM)
            s = jnp.einsum('bqd,bkd->bqk', q.astype(bf), k.astype(bf),
                           preferred_element_type=jnp.float32) + key_mask  # (Bb, S, S)
            s = s - jnp.max(s, axis=-1, keepdims=True)
            p = jnp.exp(s)
            p = p / jnp.sum(p, axis=-1, keepdims=True)   # exact divide (correctness)
            av = jnp.einsum('bqk,bkd->bqd', p.astype(bf), v.astype(bf),
                            preferred_element_type=jnp.float32)            # (Bb, S, hd)
            head_outs.append(av.reshape(rows, HEAD_DIM))
        attn = jnp.concatenate(head_outs, axis=-1)                          # (rows, E)
        attn = jnp.dot(attn.astype(bf), wo_ref[d],
                       preferred_element_type=jnp.float32) + bo             # single out-proj
        x = x + attn

        # ---------------- MLP branch: x = x + MLP(LN2(x)) ----------------
        h2 = _ln(x, ln2g, ln2b)
        m = jnp.dot(h2.astype(bf), w1_ref[d],
                    preferred_element_type=jnp.float32) + b1_ref[d]
        # tanh-approx GELU (EUP) per perf review; drifts <~1e-3 vs nn.GELU exact erf.
        m = jax.nn.gelu(m, approximate=True)
        m = jnp.dot(m.astype(bf), w2_ref[d],
                    preferred_element_type=jnp.float32) + b2
        x = x + m

    # ---- final LayerNorm on cls row + head ----
    cls_tok = x.reshape(Bb, SEQ_PAD, EMBED)[:, 0, :]                        # (Bb, E)
    hN = _ln(cls_tok, normgb_ref[0:1], normgb_ref[1:2])
    out = jnp.dot(hN.astype(bf), hw_ref[...],
                  preferred_element_type=jnp.float32) + hb_ref[...]
    o_ref[...] = out.reshape(Bb, 1, NUM_CLASSES).astype(o_ref.dtype)


# ----------------------------- one-time param packing -------------------------
def pack_params(p):
    """Convert PyTorch-layout params to kernel layout ONCE (hoisted out of forward)."""
    bf = jnp.bfloat16
    blocks = p["blocks"]

    pw = p["patch_w"].reshape(EMBED, PATCH_DIM).T.astype(bf)               # (C*P*P, E)

    # token-init: row 0 = cls + pos[0]; rows 1..N = pos[1..N] + patch bias; rest 0
    pos = p["pos_embed"][0]                                                # (SEQ, E)
    tok_init = jnp.zeros((SEQ_PAD, EMBED), jnp.float32)
    tok_init = tok_init.at[0].set(p["cls_token"].reshape(EMBED) + pos[0])
    tok_init = tok_init.at[1:SEQ].set(pos[1:] + p["patch_b"].reshape(1, EMBED))
    tok_init = tok_init.reshape(1, SEQ_PAD, EMBED)

    # fused QKV weights/bias, softmax scale folded into Q columns
    wqkv = jnp.stack([jnp.concatenate([b["wq"] * SCALE, b["wk"], b["wv"]], axis=1)
                      for b in blocks]).astype(bf)                         # (D, E, 3E)
    bqkv = jnp.stack([jnp.concatenate([b["bq"] * SCALE, b["bk"], b["bv"]], axis=1)
                      for b in blocks])                                    # (D, 1, 3E)

    def stack(key):
        return jnp.stack([b[key] for b in blocks])

    wo = stack("wo").astype(bf)                                            # (D, E, E)
    w1 = stack("w1").astype(bf)                                            # (D, E, 4E)
    b1 = stack("b1")                                                       # (D, 1, 4E)
    w2 = stack("w2").astype(bf)                                            # (D, 4E, E)

    # per-block small vectors: [ln1_g, ln1_b, bo, ln2_g, ln2_b, b2]
    vecs = jnp.stack([jnp.concatenate([b["ln1_g"], b["ln1_b"], b["bo"],
                                       b["ln2_g"], b["ln2_b"], b["b2"]], axis=0)
                      for b in blocks])                                    # (D, 6, E)

    normgb = jnp.concatenate([p["norm_g"], p["norm_b"]], axis=0)           # (2, E)
    return dict(pw=pw, tok_init=tok_init, vecs=vecs,
                wqkv=wqkv, bqkv=bqkv, wo=wo, w1=w1, b1=b1, w2=w2,
                normgb=normgb, head_w=p["head_w"].astype(bf), head_b=p["head_b"])


# ----------------------------- forward -----------------------------------------
def image_encoder_forward(x, kp):
    """ViT forward: patch_embed -> [cls; tokens] + pos -> blocks -> norm -> cls -> head."""
    B = x.shape[0]
    gh = gw = IMG // PATCH
    # Flatten non-overlapping patches in (C, ph, pw) order (matches Conv2d contraction).
    patches = x.reshape(B, C_IN, gh, PATCH, gw, PATCH)
    patches = patches.transpose(0, 2, 4, 1, 3, 5).reshape(B, N_PATCH, PATCH_DIM)
    # Pad sequence: row 0 (cls) and rows SEQ..SEQ_PAD-1 are zero patch rows.
    patches = jnp.pad(patches, ((0, 0), (1, SEQ_PAD - 1 - N_PATCH), (0, 0)))
    patches = patches.astype(jnp.bfloat16)                                 # (B, 8, 768)

    grid = (B // B_BLK,)
    out = pl.pallas_call(
        fused_vit_kernel,
        out_shape=jax.ShapeDtypeStruct((B, 1, NUM_CLASSES), jnp.float32),
        grid_spec=pltpu.PrefetchScalarGridSpec(
            num_scalar_prefetch=0,
            grid=grid,
            in_specs=[
                pl.BlockSpec((B_BLK, SEQ_PAD, PATCH_DIM), lambda b: (b, 0, 0)),   # patches
                pl.BlockSpec((PATCH_DIM, EMBED), lambda b: (0, 0)),               # pw
                pl.BlockSpec((1, SEQ_PAD, EMBED), lambda b: (0, 0, 0)),           # tok_init
                pl.BlockSpec((DEPTH, 6, EMBED), lambda b: (0, 0, 0)),             # vecs
                pl.BlockSpec((DEPTH, EMBED, 3 * EMBED), lambda b: (0, 0, 0)),     # wqkv
                pl.BlockSpec((DEPTH, 1, 3 * EMBED), lambda b: (0, 0, 0)),         # bqkv
                pl.BlockSpec((DEPTH, EMBED, EMBED), lambda b: (0, 0, 0)),         # wo
                pl.BlockSpec((DEPTH, EMBED, MLP_HIDDEN), lambda b: (0, 0, 0)),    # w1
                pl.BlockSpec((DEPTH, 1, MLP_HIDDEN), lambda b: (0, 0, 0)),        # b1
                pl.BlockSpec((DEPTH, MLP_HIDDEN, EMBED), lambda b: (0, 0, 0)),    # w2
                pl.BlockSpec((2, EMBED), lambda b: (0, 0)),                       # norm g/b
                pl.BlockSpec((EMBED, NUM_CLASSES), lambda b: (0, 0)),             # head_w
                pl.BlockSpec((1, NUM_CLASSES), lambda b: (0, 0)),                 # head_b
            ],
            out_specs=pl.BlockSpec((B_BLK, 1, NUM_CLASSES), lambda b: (b, 0, 0)),
        ),
        compiler_params=pltpu.CompilerParams(
            dimension_semantics=("parallel",)),   # 2 TCs on v7x split the batch
    )(patches, kp["pw"], kp["tok_init"], kp["vecs"],
      kp["wqkv"], kp["bqkv"], kp["wo"], kp["w1"], kp["b1"], kp["w2"],
      kp["normgb"], kp["head_w"], kp["head_b"])
    return out.reshape(B, NUM_CLASSES)


# ----------------------------- parameter init -----------------------------------
def init_params(key):
    def nrm(k, shape):
        return 0.02 * jax.random.normal(k, shape, jnp.float32)

    keys = iter(jax.random.split(key, 4 + 8 * DEPTH))
    params = {
        "patch_w": nrm(next(keys), (EMBED, C_IN, PATCH, PATCH)),
        "patch_b": jnp.zeros((EMBED,), jnp.float32),
        "cls_token": nrm(next(keys), (1, 1, EMBED)),
        "pos_embed": nrm(next(keys), (1, SEQ, EMBED)),
        "norm_g": jnp.ones((1, EMBED), jnp.float32),
        "norm_b": jnp.zeros((1, EMBED), jnp.float32),
        "head_w": nrm(next(keys), (EMBED, NUM_CLASSES)),
        "head_b": jnp.zeros((1, NUM_CLASSES), jnp.float32),
        "blocks": [],
    }
    for _ in range(DEPTH):
        blk = {
            "ln1_g": jnp.ones((1, EMBED), jnp.float32),
            "ln1_b": jnp.zeros((1, EMBED), jnp.float32),
            "wq": nrm(next(keys), (EMBED, EMBED)),
            "bq": jnp.zeros((1, EMBED), jnp.float32),
            "wk": nrm(next(keys), (EMBED, EMBED)),
            "bk": jnp.zeros((1, EMBED), jnp.float32),
            "wv": nrm(next(keys), (EMBED, EMBED)),
            "bv": jnp.zeros((1, EMBED), jnp.float32),
            "wo": nrm(next(keys), (EMBED, EMBED)),
            "bo": jnp.zeros((1, EMBED), jnp.float32),
            "ln2_g": jnp.ones((1, EMBED), jnp.float32),
            "ln2_b": jnp.zeros((1, EMBED), jnp.float32),
            "w1": nrm(next(keys), (EMBED, MLP_HIDDEN)),
            "b1": jnp.zeros((1, MLP_HIDDEN), jnp.float32),
            "w2": nrm(next(keys), (MLP_HIDDEN, EMBED)),
            "b2": jnp.zeros((1, EMBED), jnp.float32),
        }
        params["blocks"].append(blk)
    return params


if __name__ == "__main__":
    key = jax.random.PRNGKey(0)
    pkey, xkey = jax.random.split(key)
    params = init_params(pkey)
    kparams = pack_params(params)           # hoisted: done ONCE, not per forward call
    x = jax.random.normal(xkey, (2, C_IN, IMG, IMG), jnp.float32)   # NCHW, like PyTorch

    forward = jax.jit(image_encoder_forward)
    out = jax.block_until_ready(forward(x, kparams))
    assert out.shape == (2, NUM_CLASSES), out.shape
    assert bool(jnp.all(jnp.isfinite(out)))
    print("KERNEL_OK")
</pallas_src>

<mosaic_0001>
module attributes {stable_mosaic.version = 11 : i64} {
  func.func @fused_vit_kernel(%arg0: i32, %arg1: memref<1x8x768xbf16, #tpu.memory_space<vmem>>, %arg2: memref<768x32xbf16, #tpu.memory_space<vmem>>, %arg3: memref<1x8x32xf32, #tpu.memory_space<vmem>>, %arg4: memref<2x6x32xf32, #tpu.memory_space<vmem>>, %arg5: memref<2x32x96xbf16, #tpu.memory_space<vmem>>, %arg6: memref<2x1x96xf32, #tpu.memory_space<vmem>>, %arg7: memref<2x32x32xbf16, #tpu.memory_space<vmem>>, %arg8: memref<2x32x128xbf16, #tpu.memory_space<vmem>>, %arg9: memref<2x1x128xf32, #tpu.memory_space<vmem>>, %arg10: memref<2x128x32xbf16, #tpu.memory_space<vmem>>, %arg11: memref<2x32xf32, #tpu.memory_space<vmem>>, %arg12: memref<32x48xbf16, #tpu.memory_space<vmem>>, %arg13: memref<1x48xf32, #tpu.memory_space<vmem>>, %arg14: memref<1x1x48xf32, #tpu.memory_space<vmem>>) attributes {dimension_semantics = [#tpu.dimension_semantics<parallel>], iteration_bounds = array<i64: 2>, scalar_prefetch = 0 : i64, scratch_operands = 0 : i64, tpu.core_type = #tpu.core_type<tc>, window_params = [{transform_indices = @transform_0, window_bounds = array<i64: 1, 8, 768>}, {pipeline_mode = #tpu.pipeline_mode<synchronous>, transform_indices = @transform_1, window_bounds = array<i64: 768, 32>}, {pipeline_mode = #tpu.pipeline_mode<synchronous>, transform_indices = @transform_2, window_bounds = array<i64: 1, 8, 32>}, {pipeline_mode = #tpu.pipeline_mode<synchronous>, transform_indices = @transform_3, window_bounds = array<i64: 2, 6, 32>}, {pipeline_mode = #tpu.pipeline_mode<synchronous>, transform_indices = @transform_4, window_bounds = array<i64: 2, 32, 96>}, {pipeline_mode = #tpu.pipeline_mode<synchronous>, transform_indices = @transform_5, window_bounds = array<i64: 2, 1, 96>}, {pipeline_mode = #tpu.pipeline_mode<synchronous>, transform_indices = @transform_6, window_bounds = array<i64: 2, 32, 32>}, {pipeline_mode = #tpu.pipeline_mode<synchronous>, transform_indices = @transform_7, window_bounds = array<i64: 2, 32, 128>}, {pipeline_mode = #tpu.pipeline_mode<synchronous>, transform_indices = @transform_8, window_bounds = array<i64: 2, 1, 128>}, {pipeline_mode = #tpu.pipeline_mode<synchronous>, transform_indices = @transform_9, window_bounds = array<i64: 2, 128, 32>}, {pipeline_mode = #tpu.pipeline_mode<synchronous>, transform_indices = @transform_10, window_bounds = array<i64: 2, 32>}, {pipeline_mode = #tpu.pipeline_mode<synchronous>, transform_indices = @transform_11, window_bounds = array<i64: 32, 48>}, {pipeline_mode = #tpu.pipeline_mode<synchronous>, transform_indices = @transform_12, window_bounds = array<i64: 1, 48>}, {transform_indices = @transform_13, window_bounds = array<i64: 1, 1, 48>}]} {
    %c0 = arith.constant 0 : index
    %c0_0 = arith.constant 0 : index
    %c0_1 = arith.constant 0 : index
    %0 = vector.load %arg1[%c0, %c0_0, %c0_1] : memref<1x8x768xbf16, #tpu.memory_space<vmem>>, vector<1x8x768xbf16>
    %1 = vector.shape_cast %0 : vector<1x8x768xbf16> to vector<8x768xbf16>
    %c0_2 = arith.constant 0 : index
    %c0_3 = arith.constant 0 : index
    %2 = vector.load %arg2[%c0_2, %c0_3] : memref<768x32xbf16, #tpu.memory_space<vmem>>, vector<768x32xbf16>
    %cst = arith.constant dense<0.000000e+00> : vector<8x32xf32>
    %3 = tpu.matmul %1, %2, %cst {dimension_numbers = #tpu.dot_dimension_numbers<[1], [0], [0], [1], [0, 0, 1, 1], [], []>} : vector<8x768xbf16>, vector<768x32xbf16>, vector<8x32xf32> -> vector<8x32xf32>
    %c0_4 = arith.constant 0 : index
    %c0_5 = arith.constant 0 : index
    %c0_6 = arith.constant 0 : index
    %4 = vector.load %arg3[%c0_4, %c0_5, %c0_6] : memref<1x8x32xf32, #tpu.memory_space<vmem>>, vector<1x8x32xf32>
    %5 = vector.shape_cast %4 : vector<1x8x32xf32> to vector<8x32xf32>
    %6 = arith.addf %3, %5 : vector<8x32xf32>
    %7 = tpu.iota {dimensions = array<i32: 2>} : vector<1x1x8xi32>
    %c5_i32 = arith.constant 5 : i32
    %8 = vector.broadcast %c5_i32 : i32 to vector<1x1x8xi32>
    %9 = arith.cmpi slt, %7, %8 : vector<1x1x8xi32>
    %cst_7 = arith.constant 0.000000e+00 : f32
    %cst_8 = arith.constant -1.000000e+30 : f32
    %10 = vector.broadcast %cst_7 : f32 to vector<1x1x8xf32>
    %11 = vector.broadcast %cst_8 : f32 to vector<1x1x8xf32>
    %12 = arith.select %9, %10, %11 : vector<1x1x8xi1>, vector<1x1x8xf32>
    %c0_9 = arith.constant 0 : index
    %c0_10 = arith.constant 0 : index
    %c0_11 = arith.constant 0 : index
    %13 = vector.load %arg4[%c0_9, %c0_10, %c0_11] : memref<2x6x32xf32, #tpu.memory_space<vmem>>, vector<2x6x32xf32>
    %14 = vector.extract_strided_slice %13 {offsets = [0, 0, 0], sizes = [1, 1, 32], strides = [1, 1, 1]} : vector<2x6x32xf32> to vector<1x1x32xf32>
    %15 = vector.shape_cast %14 : vector<1x1x32xf32> to vector<1x32xf32>
    %16 = vector.extract_strided_slice %13 {offsets = [0, 1, 0], sizes = [1, 1, 32], strides = [1, 1, 1]} : vector<2x6x32xf32> to vector<1x1x32xf32>
    %17 = vector.shape_cast %16 : vector<1x1x32xf32> to vector<1x32xf32>
    %18 = vector.extract_strided_slice %13 {offsets = [0, 2, 0], sizes = [1, 1, 32], strides = [1, 1, 1]} : vector<2x6x32xf32> to vector<1x1x32xf32>
    %19 = vector.shape_cast %18 : vector<1x1x32xf32> to vector<1x32xf32>
    %20 = vector.extract_strided_slice %13 {offsets = [0, 3, 0], sizes = [1, 1, 32], strides = [1, 1, 1]} : vector<2x6x32xf32> to vector<1x1x32xf32>
    %21 = vector.shape_cast %20 : vector<1x1x32xf32> to vector<1x32xf32>
    %22 = vector.extract_strided_slice %13 {offsets = [0, 4, 0], sizes = [1, 1, 32], strides = [1, 1, 1]} : vector<2x6x32xf32> to vector<1x1x32xf32>
    %23 = vector.shape_cast %22 : vector<1x1x32xf32> to vector<1x32xf32>
    %24 = vector.extract_strided_slice %13 {offsets = [0, 5, 0], sizes = [1, 1, 32], strides = [1, 1, 1]} : vector<2x6x32xf32> to vector<1x1x32xf32>
    %25 = vector.shape_cast %24 : vector<1x1x32xf32> to vector<1x32xf32>
    %cst_12 = arith.constant dense<0.000000e+00> : vector<8xf32>
    %26 = vector.multi_reduction <add>, %6, %cst_12 [1] : vector<8x32xf32> to vector<8xf32>
    %27 = vector.shape_cast %26 : vector<8xf32> to vector<8x1xf32>
    %cst_13 = arith.constant 3.200000e+01 : f32
    %28 = vector.broadcast %cst_13 : f32 to vector<8x1xf32>
    %29 = arith.divf %27, %28 : vector<8x1xf32>
    %30 = vector.broadcast %29 : vector<8x1xf32> to vector<8x32xf32>
    %31 = arith.subf %6, %30 : vector<8x32xf32>
    %32 = arith.mulf %31, %31 : vector<8x32xf32>
    %cst_14 = arith.constant dense<0.000000e+00> : vector<8xf32>
    %33 = vector.multi_reduction <add>, %32, %cst_14 [1] : vector<8x32xf32> to vector<8xf32>
    %34 = vector.shape_cast %33 : vector<8xf32> to vector<8x1xf32>
    %cst_15 = arith.constant 3.200000e+01 : f32
    %35 = vector.broadcast %cst_15 : f32 to vector<8x1xf32>
    %36 = arith.divf %34, %35 : vector<8x1xf32>
    %cst_16 = arith.constant 9.99999997E-7 : f32
    %37 = vector.broadcast %cst_16 : f32 to vector<8x1xf32>
    %38 = arith.addf %36, %37 : vector<8x1xf32>
    %39 = math.rsqrt %38 : vector<8x1xf32>
    %40 = vector.broadcast %39 : vector<8x1xf32> to vector<8x32xf32>
    %41 = arith.mulf %31, %40 : vector<8x32xf32>
    %42 = vector.broadcast %15 : vector<1x32xf32> to vector<8x32xf32>
    %43 = arith.mulf %41, %42 : vector<8x32xf32>
    %44 = vector.broadcast %17 : vector<1x32xf32> to vector<8x32xf32>
    %45 = arith.addf %43, %44 : vector<8x32xf32>
    %46 = arith.truncf %45 : vector<8x32xf32> to vector<8x32xbf16>
    %c0_17 = arith.constant 0 : index
    %c0_18 = arith.constant 0 : index
    %c0_19 = arith.constant 0 : index
    %47 = vector.load %arg5[%c0_17, %c0_18, %c0_19] : memref<2x32x96xbf16, #tpu.memory_space<vmem>>, vector<1x32x96xbf16>
    %48 = vector.shape_cast %47 : vector<1x32x96xbf16> to vector<32x96xbf16>
    %cst_20 = arith.constant dense<0.000000e+00> : vector<8x96xf32>
    %49 = tpu.matmul %46, %48, %cst_20 {dimension_numbers = #tpu.dot_dimension_numbers<[1], [0], [0], [1], [0, 0, 1, 1], [], []>} : vector<8x32xbf16>, vector<32x96xbf16>, vector<8x96xf32> -> vector<8x96xf32>
    %c0_21 = arith.constant 0 : index
    %c0_22 = arith.constant 0 : index
    %c0_23 = arith.constant 0 : index
    %50 = vector.load %arg6[%c0_21, %c0_22, %c0_23] : memref<2x1x96xf32, #tpu.memory_space<vmem>>, vector<1x1x96xf32>
    %51 = vector.shape_cast %50 : vector<1x1x96xf32> to vector<1x96xf32>
    %52 = vector.broadcast %51 : vector<1x96xf32> to vector<8x96xf32>
    %53 = arith.addf %49, %52 : vector<8x96xf32>
    %54 = vector.extract_strided_slice %53 {offsets = [0, 0], sizes = [8, 16], strides = [1, 1]} : vector<8x96xf32> to vector<8x16xf32>
    %55 = vector.shape_cast %54 : vector<8x16xf32> to vector<1x8x16xf32>
    %56 = vector.extract_strided_slice %53 {offsets = [0, 32], sizes = [8, 16], strides = [1, 1]} : vector<8x96xf32> to vector<8x16xf32>
    %57 = vector.shape_cast %56 : vector<8x16xf32> to vector<1x8x16xf32>
    %58 = vector.extract_strided_slice %53 {offsets = [0, 64], sizes = [8, 16], strides = [1, 1]} : vector<8x96xf32> to vector<8x16xf32>
    %59 = vector.shape_cast %58 : vector<8x16xf32> to vector<1x8x16xf32>
    %60 = arith.truncf %55 : vector<1x8x16xf32> to vector<1x8x16xbf16>
    %61 = arith.truncf %57 : vector<1x8x16xf32> to vector<1x8x16xbf16>
    "tpu.trace_start"() <{level = 10 : i32, message = "bqd,bkd->bqk"}> : () -> ()
    %cst_24 = arith.constant dense<0.000000e+00> : vector<1x8x8xf32>
    %62 = tpu.matmul %60, %61, %cst_24 {dimension_numbers = #tpu.dot_dimension_numbers<[2], [2], [1], [1], [0, 0, 0, 1, 1, 1], [0], [0]>} : vector<1x8x16xbf16>, vector<1x8x16xbf16>, vector<1x8x8xf32> -> vector<1x8x8xf32>
    "tpu.trace_stop"() : () -> ()
    %63 = vector.broadcast %12 : vector<1x1x8xf32> to vector<1x8x8xf32>
    %64 = arith.addf %62, %63 : vector<1x8x8xf32>
    %cst_25 = arith.constant dense<0xFF800000> : vector<1x8xf32>
    %65 = vector.multi_reduction <maximumf>, %64, %cst_25 [2] : vector<1x8x8xf32> to vector<1x8xf32>
    %66 = vector.shape_cast %65 : vector<1x8xf32> to vector<1x8x1xf32>
    %67 = vector.broadcast %66 : vector<1x8x1xf32> to vector<1x8x8xf32>
    %68 = arith.subf %64, %67 : vector<1x8x8xf32>
    %69 = math.exp %68 : vector<1x8x8xf32>
    %cst_26 = arith.constant dense<0.000000e+00> : vector<1x8xf32>
    %70 = vector.multi_reduction <add>, %69, %cst_26 [2] : vector<1x8x8xf32> to vector<1x8xf32>
    %71 = vector.shape_cast %70 : vector<1x8xf32> to vector<1x8x1xf32>
    %72 = vector.broadcast %71 : vector<1x8x1xf32> to vector<1x8x8xf32>
    %73 = arith.divf %69, %72 : vector<1x8x8xf32>
    %74 = arith.truncf %73 : vector<1x8x8xf32> to vector<1x8x8xbf16>
    %75 = arith.truncf %59 : vector<1x8x16xf32> to vector<1x8x16xbf16>
    "tpu.trace_start"() <{level = 10 : i32, message = "bqk,bkd->bqd"}> : () -> ()
    %cst_27 = arith.constant dense<0.000000e+00> : vector<1x8x16xf32>
    %76 = tpu.matmul %74, %75, %cst_27 {dimension_numbers = #tpu.dot_dimension_numbers<[2], [1], [1], [2], [0, 0, 0, 1, 1, 2], [0], [0]>} : vector<1x8x8xbf16>, vector<1x8x16xbf16>, vector<1x8x16xf32> -> vector<1x8x16xf32>
    "tpu.trace_stop"() : () -> ()
    %77 = vector.shape_cast %76 : vector<1x8x16xf32> to vector<8x16xf32>
    %78 = vector.extract_strided_slice %53 {offsets = [0, 16], sizes = [8, 16], strides = [1, 1]} : vector<8x96xf32> to vector<8x16xf32>
    %79 = vector.shape_cast %78 : vector<8x16xf32> to vector<1x8x16xf32>
    %80 = vector.extract_strided_slice %53 {offsets = [0, 48], sizes = [8, 16], strides = [1, 1]} : vector<8x96xf32> to vector<8x16xf32>
    %81 = vector.shape_cast %80 : vector<8x16xf32> to vector<1x8x16xf32>
    %82 = vector.extract_strided_slice %53 {offsets = [0, 80], sizes = [8, 16], strides = [1, 1]} : vector<8x96xf32> to vector<8x16xf32>
    %83 = vector.shape_cast %82 : vector<8x16xf32> to vector<1x8x16xf32>
    %84 = arith.truncf %79 : vector<1x8x16xf32> to vector<1x8x16xbf16>
    %85 = arith.truncf %81 : vector<1x8x16xf32> to vector<1x8x16xbf16>
    "tpu.trace_start"() <{level = 10 : i32, message = "bqd,bkd->bqk"}> : () -> ()
    %cst_28 = arith.constant dense<0.000000e+00> : vector<1x8x8xf32>
    %86 = tpu.matmul %84, %85, %cst_28 {dimension_numbers = #tpu.dot_dimension_numbers<[2], [2], [1], [1], [0, 0, 0, 1, 1, 1], [0], [0]>} : vector<1x8x16xbf16>, vector<1x8x16xbf16>, vector<1x8x8xf32> -> vector<1x8x8xf32>
    "tpu.trace_stop"() : () -> ()
    %87 = vector.broadcast %12 : vector<1x1x8xf32> to vector<1x8x8xf32>
    %88 = arith.addf %86, %87 : vector<1x8x8xf32>
    %cst_29 = arith.constant dense<0xFF800000> : vector<1x8xf32>
    %89 = vector.multi_reduction <maximumf>, %88, %cst_29 [2] : vector<1x8x8xf32> to vector<1x8xf32>
    %90 = vector.shape_cast %89 : vector<1x8xf32> to vector<1x8x1xf32>
    %91 = vector.broadcast %90 : vector<1x8x1xf32> to vector<1x8x8xf32>
    %92 = arith.subf %88, %91 : vector<1x8x8xf32>
    %93 = math.exp %92 : vector<1x8x8xf32>
    %cst_30 = arith.constant dense<0.000000e+00> : vector<1x8xf32>
    %94 = vector.multi_reduction <add>, %93, %cst_30 [2] : vector<1x8x8xf32> to vector<1x8xf32>
    %95 = vector.shape_cast %94 : vector<1x8xf32> to vector<1x8x1xf32>
    %96 = vector.broadcast %95 : vector<1x8x1xf32> to vector<1x8x8xf32>
    %97 = arith.divf %93, %96 : vector<1x8x8xf32>
    %98 = arith.truncf %97 : vector<1x8x8xf32> to vector<1x8x8xbf16>
    %99 = arith.truncf %83 : vector<1x8x16xf32> to vector<1x8x16xbf16>
    "tpu.trace_start"() <{level = 10 : i32, message = "bqk,bkd->bqd"}> : () -> ()
    %cst_31 = arith.constant dense<0.000000e+00> : vector<1x8x16xf32>
    %100 = tpu.matmul %98, %99, %cst_31 {dimension_numbers = #tpu.dot_dimension_numbers<[2], [1], [1], [2], [0, 0, 0, 1, 1, 2], [0], [0]>} : vector<1x8x8xbf16>, vector<1x8x16xbf16>, vector<1x8x16xf32> -> vector<1x8x16xf32>
    "tpu.trace_stop"() : () -> ()
    %101 = vector.shape_cast %100 : vector<1x8x16xf32> to vector<8x16xf32>
    %102 = tpu.concatenate %77, %101 in 1 : vector<8x16xf32>, vector<8x16xf32> -> vector<8x32xf32>
    %103 = arith.truncf %102 : vector<8x32xf32> to vector<8x32xbf16>
    %c0_32 = arith.constant 0 : index
    %c0_33 = arith.constant 0 : index
    %c0_34 = arith.constant 0 : index
    %104 = vector.load %arg7[%c0_32, %c0_33, %c0_34] : memref<2x32x32xbf16, #tpu.memory_space<vmem>>, vector<1x32x32xbf16>
    %105 = vector.shape_cast %104 : vector<1x32x32xbf16> to vector<32x32xbf16>
    %cst_35 = arith.constant dense<0.000000e+00> : vector<8x32xf32>
    %106 = tpu.matmul %103, %105, %cst_35 {dimension_numbers = #tpu.dot_dimension_numbers<[1], [0], [0], [1], [0, 0, 1, 1], [], []>} : vector<8x32xbf16>, vector<32x32xbf16>, vector<8x32xf32> -> vector<8x32xf32>
    %107 = vector.broadcast %19 : vector<1x32xf32> to vector<8x32xf32>
    %108 = arith.addf %106, %107 : vector<8x32xf32>
    %109 = arith.addf %6, %108 : vector<8x32xf32>
    %cst_36 = arith.constant dense<0.000000e+00> : vector<8xf32>
    %110 = vector.multi_reduction <add>, %109, %cst_36 [1] : vector<8x32xf32> to vector<8xf32>
    %111 = vector.shape_cast %110 : vector<8xf32> to vector<8x1xf32>
    %cst_37 = arith.constant 3.200000e+01 : f32
    %112 = vector.broadcast %cst_37 : f32 to vector<8x1xf32>
    %113 = arith.divf %111, %112 : vector<8x1xf32>
    %114 = vector.broadcast %113 : vector<8x1xf32> to vector<8x32xf32>
    %115 = arith.subf %109, %114 : vector<8x32xf32>
    %116 = arith.mulf %115, %115 : vector<8x32xf32>
    %cst_38 = arith.constant dense<0.000000e+00> : vector<8xf32>
    %117 = vector.multi_reduction <add>, %116, %cst_38 [1] : vector<8x32xf32> to vector<8xf32>
    %118 = vector.shape_cast %117 : vector<8xf32> to vector<8x1xf32>
    %cst_39 = arith.constant 3.200000e+01 : f32
    %119 = vector.broadcast %cst_39 : f32 to vector<8x1xf32>
    %120 = arith.divf %118, %119 : vector<8x1xf32>
    %cst_40 = arith.constant 9.99999997E-7 : f32
    %121 = vector.broadcast %cst_40 : f32 to vector<8x1xf32>
    %122 = arith.addf %120, %121 : vector<8x1xf32>
    %123 = math.rsqrt %122 : vector<8x1xf32>
    %124 = vector.broadcast %123 : vector<8x1xf32> to vector<8x32xf32>
    %125 = arith.mulf %115, %124 : vector<8x32xf32>
    %126 = vector.broadcast %21 : vector<1x32xf32> to vector<8x32xf32>
    %127 = arith.mulf %125, %126 : vector<8x32xf32>
    %128 = vector.broadcast %23 : vector<1x32xf32> to vector<8x32xf32>
    %129 = arith.addf %127, %128 : vector<8x32xf32>
    %130 = arith.truncf %129 : vector<8x32xf32> to vector<8x32xbf16>
    %c0_41 = arith.constant 0 : index
    %c0_42 = arith.constant 0 : index
    %c0_43 = arith.constant 0 : index
    %131 = vector.load %arg8[%c0_41, %c0_42, %c0_43] : memref<2x32x128xbf16, #tpu.memory_space<vmem>>, vector<1x32x128xbf16>
    %132 = vector.shape_cast %131 : vector<1x32x128xbf16> to vector<32x128xbf16>
    %cst_44 = arith.constant dense<0.000000e+00> : vector<8x128xf32>
    %133 = tpu.matmul %130, %132, %cst_44 {dimension_numbers = #tpu.dot_dimension_numbers<[1], [0], [0], [1], [0, 0, 1, 1], [], []>} : vector<8x32xbf16>, vector<32x128xbf16>, vector<8x128xf32> -> vector<8x128xf32>
    %c0_45 = arith.constant 0 : index
    %c0_46 = arith.constant 0 : index
    %c0_47 = arith.constant 0 : index
    %134 = vector.load %arg9[%c0_45, %c0_46, %c0_47] : memref<2x1x128xf32, #tpu.memory_space<vmem>>, vector<1x1x128xf32>
    %135 = vector.shape_cast %134 : vector<1x1x128xf32> to vector<1x128xf32>
    %136 = vector.broadcast %135 : vector<1x128xf32> to vector<8x128xf32>
    %137 = arith.addf %133, %136 : vector<8x128xf32>
    %138 = arith.mulf %137, %137 : vector<8x128xf32>
    %139 = arith.mulf %137, %138 : vector<8x128xf32>
    %cst_48 = arith.constant 4.471500e-02 : f32
    %140 = vector.broadcast %cst_48 : f32 to vector<8x128xf32>
    %141 = arith.mulf %140, %139 : vector<8x128xf32>
    %142 = arith.addf %137, %141 : vector<8x128xf32>
    %cst_49 = arith.constant 0.797884583 : f32
    %143 = vector.broadcast %cst_49 : f32 to vector<8x128xf32>
    %144 = arith.mulf %143, %142 : vector<8x128xf32>
    %145 = math.tanh %144 : vector<8x128xf32>
    %cst_50 = arith.constant 1.000000e+00 : f32
    %146 = vector.broadcast %cst_50 : f32 to vector<8x128xf32>
    %147 = arith.addf %146, %145 : vector<8x128xf32>
    %cst_51 = arith.constant 5.000000e-01 : f32
    %148 = vector.broadcast %cst_51 : f32 to vector<8x128xf32>
    %149 = arith.mulf %148, %147 : vector<8x128xf32>
    %150 = arith.mulf %137, %149 : vector<8x128xf32>
    %151 = arith.truncf %150 : vector<8x128xf32> to vector<8x128xbf16>
    %c0_52 = arith.constant 0 : index
    %c0_53 = arith.constant 0 : index
    %c0_54 = arith.constant 0 : index
    %152 = vector.load %arg10[%c0_52, %c0_53, %c0_54] : memref<2x128x32xbf16, #tpu.memory_space<vmem>>, vector<1x128x32xbf16>
    %153 = vector.shape_cast %152 : vector<1x128x32xbf16> to vector<128x32xbf16>
    %cst_55 = arith.constant dense<0.000000e+00> : vector<8x32xf32>
    %154 = tpu.matmul %151, %153, %cst_55 {dimension_numbers = #tpu.dot_dimension_numbers<[1], [0], [0], [1], [0, 0, 1, 1], [], []>} : vector<8x128xbf16>, vector<128x32xbf16>, vector<8x32xf32> -> vector<8x32xf32>
    %155 = vector.broadcast %25 : vector<1x32xf32> to vector<8x32xf32>
    %156 = arith.addf %154, %155 : vector<8x32xf32>
    %157 = arith.addf %109, %156 : vector<8x32xf32>
    %158 = vector.extract_strided_slice %13 {offsets = [1, 0, 0], sizes = [1, 1, 32], strides = [1, 1, 1]} : vector<2x6x32xf32> to vector<1x1x32xf32>
    %159 = vector.shape_cast %158 : vector<1x1x32xf32> to vector<1x32xf32>
    %160 = vector.extract_strided_slice %13 {offsets = [1, 1, 0], sizes = [1, 1, 32], strides = [1, 1, 1]} : vector<2x6x32xf32> to vector<1x1x32xf32>
    %161 = vector.shape_cast %160 : vector<1x1x32xf32> to vector<1x32xf32>
    %162 = vector.extract_strided_slice %13 {offsets = [1, 2, 0], sizes = [1, 1, 32], strides = [1, 1, 1]} : vector<2x6x32xf32> to vector<1x1x32xf32>
    %163 = vector.shape_cast %162 : vector<1x1x32xf32> to vector<1x32xf32>
    %164 = vector.extract_strided_slice %13 {offsets = [1, 3, 0], sizes = [1, 1, 32], strides = [1, 1, 1]} : vector<2x6x32xf32> to vector<1x1x32xf32>
    %165 = vector.shape_cast %164 : vector<1x1x32xf32> to vector<1x32xf32>
    %166 = vector.extract_strided_slice %13 {offsets = [1, 4, 0], sizes = [1, 1, 32], strides = [1, 1, 1]} : vector<2x6x32xf32> to vector<1x1x32xf32>
    %167 = vector.shape_cast %166 : vector<1x1x32xf32> to vector<1x32xf32>
    %168 = vector.extract_strided_slice %13 {offsets = [1, 5, 0], sizes = [1, 1, 32], strides = [1, 1, 1]} : vector<2x6x32xf32> to vector<1x1x32xf32>
    %169 = vector.shape_cast %168 : vector<1x1x32xf32> to vector<1x32xf32>
    %cst_56 = arith.constant dense<0.000000e+00> : vector<8xf32>
    %170 = vector.multi_reduction <add>, %157, %cst_56 [1] : vector<8x32xf32> to vector<8xf32>
    %171 = vector.shape_cast %170 : vector<8xf32> to vector<8x1xf32>
    %cst_57 = arith.constant 3.200000e+01 : f32
    %172 = vector.broadcast %cst_57 : f32 to vector<8x1xf32>
    %173 = arith.divf %171, %172 : vector<8x1xf32>
    %174 = vector.broadcast %173 : vector<8x1xf32> to vector<8x32xf32>
    %175 = arith.subf %157, %174 : vector<8x32xf32>
    %176 = arith.mulf %175, %175 : vector<8x32xf32>
    %cst_58 = arith.constant dense<0.000000e+00> : vector<8xf32>
    %177 = vector.multi_reduction <add>, %176, %cst_58 [1] : vector<8x32xf32> to vector<8xf32>
    %178 = vector.shape_cast %177 : vector<8xf32> to vector<8x1xf32>
    %cst_59 = arith.constant 3.200000e+01 : f32
    %179 = vector.broadcast %cst_59 : f32 to vector<8x1xf32>
    %180 = arith.divf %178, %179 : vector<8x1xf32>
    %cst_60 = arith.constant 9.99999997E-7 : f32
    %181 = vector.broadcast %cst_60 : f32 to vector<8x1xf32>
    %182 = arith.addf %180, %181 : vector<8x1xf32>
    %183 = math.rsqrt %182 : vector<8x1xf32>
    %184 = vector.broadcast %183 : vector<8x1xf32> to vector<8x32xf32>
    %185 = arith.mulf %175, %184 : vector<8x32xf32>
    %186 = vector.broadcast %159 : vector<1x32xf32> to vector<8x32xf32>
    %187 = arith.mulf %185, %186 : vector<8x32xf32>
    %188 = vector.broadcast %161 : vector<1x32xf32> to vector<8x32xf32>
    %189 = arith.addf %187, %188 : vector<8x32xf32>
    %190 = arith.truncf %189 : vector<8x32xf32> to vector<8x32xbf16>
    %c1 = arith.constant 1 : index
    %c0_61 = arith.constant 0 : index
    %c0_62 = arith.constant 0 : index
    %191 = vector.load %arg5[%c1, %c0_61, %c0_62] : memref<2x32x96xbf16, #tpu.memory_space<vmem>>, vector<1x32x96xbf16>
    %192 = vector.shape_cast %191 : vector<1x32x96xbf16> to vector<32x96xbf16>
    %cst_63 = arith.constant dense<0.000000e+00> : vector<8x96xf32>
    %193 = tpu.matmul %190, %192, %cst_63 {dimension_numbers = #tpu.dot_dimension_numbers<[1], [0], [0], [1], [0, 0, 1, 1], [], []>} : vector<8x32xbf16>, vector<32x96xbf16>, vector<8x96xf32> -> vector<8x96xf32>
    %c1_64 = arith.constant 1 : index
    %c0_65 = arith.constant 0 : index
    %c0_66 = arith.constant 0 : index
    %194 = vector.load %arg6[%c1_64, %c0_65, %c0_66] : memref<2x1x96xf32, #tpu.memory_space<vmem>>, vector<1x1x96xf32>
    %195 = vector.shape_cast %194 : vector<1x1x96xf32> to vector<1x96xf32>
    %196 = vector.broadcast %195 : vector<1x96xf32> to vector<8x96xf32>
    %197 = arith.addf %193, %196 : vector<8x96xf32>
    %198 = vector.extract_strided_slice %197 {offsets = [0, 0], sizes = [8, 16], strides = [1, 1]} : vector<8x96xf32> to vector<8x16xf32>
    %199 = vector.shape_cast %198 : vector<8x16xf32> to vector<1x8x16xf32>
    %200 = vector.extract_strided_slice %197 {offsets = [0, 32], sizes = [8, 16], strides = [1, 1]} : vector<8x96xf32> to vector<8x16xf32>
    %201 = vector.shape_cast %200 : vector<8x16xf32> to vector<1x8x16xf32>
    %202 = vector.extract_strided_slice %197 {offsets = [0, 64], sizes = [8, 16], strides = [1, 1]} : vector<8x96xf32> to vector<8x16xf32>
    %203 = vector.shape_cast %202 : vector<8x16xf32> to vector<1x8x16xf32>
    %204 = arith.truncf %199 : vector<1x8x16xf32> to vector<1x8x16xbf16>
    %205 = arith.truncf %201 : vector<1x8x16xf32> to vector<1x8x16xbf16>
    "tpu.trace_start"() <{level = 10 : i32, message = "bqd,bkd->bqk"}> : () -> ()
    %cst_67 = arith.constant dense<0.000000e+00> : vector<1x8x8xf32>
    %206 = tpu.matmul %204, %205, %cst_67 {dimension_numbers = #tpu.dot_dimension_numbers<[2], [2], [1], [1], [0, 0, 0, 1, 1, 1], [0], [0]>} : vector<1x8x16xbf16>, vector<1x8x16xbf16>, vector<1x8x8xf32> -> vector<1x8x8xf32>
    "tpu.trace_stop"() : () -> ()
    %207 = vector.broadcast %12 : vector<1x1x8xf32> to vector<1x8x8xf32>
    %208 = arith.addf %206, %207 : vector<1x8x8xf32>
    %cst_68 = arith.constant dense<0xFF800000> : vector<1x8xf32>
    %209 = vector.multi_reduction <maximumf>, %208, %cst_68 [2] : vector<1x8x8xf32> to vector<1x8xf32>
    %210 = vector.shape_cast %209 : vector<1x8xf32> to vector<1x8x1xf32>
    %211 = vector.broadcast %210 : vector<1x8x1xf32> to vector<1x8x8xf32>
    %212 = arith.subf %208, %211 : vector<1x8x8xf32>
    %213 = math.exp %212 : vector<1x8x8xf32>
    %cst_69 = arith.constant dense<0.000000e+00> : vector<1x8xf32>
    %214 = vector.multi_reduction <add>, %213, %cst_69 [2] : vector<1x8x8xf32> to vector<1x8xf32>
    %215 = vector.shape_cast %214 : vector<1x8xf32> to vector<1x8x1xf32>
    %216 = vector.broadcast %215 : vector<1x8x1xf32> to vector<1x8x8xf32>
    %217 = arith.divf %213, %216 : vector<1x8x8xf32>
    %218 = arith.truncf %217 : vector<1x8x8xf32> to vector<1x8x8xbf16>
    %219 = arith.truncf %203 : vector<1x8x16xf32> to vector<1x8x16xbf16>
    "tpu.trace_start"() <{level = 10 : i32, message = "bqk,bkd->bqd"}> : () -> ()
    %cst_70 = arith.constant dense<0.000000e+00> : vector<1x8x16xf32>
    %220 = tpu.matmul %218, %219, %cst_70 {dimension_numbers = #tpu.dot_dimension_numbers<[2], [1], [1], [2], [0, 0, 0, 1, 1, 2], [0], [0]>} : vector<1x8x8xbf16>, vector<1x8x16xbf16>, vector<1x8x16xf32> -> vector<1x8x16xf32>
    "tpu.trace_stop"() : () -> ()
    %221 = vector.shape_cast %220 : vector<1x8x16xf32> to vector<8x16xf32>
    %222 = vector.extract_strided_slice %197 {offsets = [0, 16], sizes = [8, 16], strides = [1, 1]} : vector<8x96xf32> to vector<8x16xf32>
    %223 = vector.shape_cast %222 : vector<8x16xf32> to vector<1x8x16xf32>
    %224 = vector.extract_strided_slice %197 {offsets = [0, 48], sizes = [8, 16], strides = [1, 1]} : vector<8x96xf32> to vector<8x16xf32>
    %225 = vector.shape_cast %224 : vector<8x16xf32> to vector<1x8x16xf32>
    %226 = vector.extract_strided_slice %197 {offsets = [0, 80], sizes = [8, 16], strides = [1, 1]} : vector<8x96xf32> to vector<8x16xf32>
    %227 = vector.shape_cast %226 : vector<8x16xf32> to vector<1x8x16xf32>
    %228 = arith.truncf %223 : vector<1x8x16xf32> to vector<1x8x16xbf16>
    %229 = arith.truncf %225 : vector<1x8x16xf32> to vector<1x8x16xbf16>
    "tpu.trace_start"() <{level = 10 : i32, message = "bqd,bkd->bqk"}> : () -> ()
    %cst_71 = arith.constant dense<0.000000e+00> : vector<1x8x8xf32>
    %230 = tpu.matmul %228, %229, %cst_71 {dimension_numbers = #tpu.dot_dimension_numbers<[2], [2], [1], [1], [0, 0, 0, 1, 1, 1], [0], [0]>} : vector<1x8x16xbf16>, vector<1x8x16xbf16>, vector<1x8x8xf32> -> vector<1x8x8xf32>
    "tpu.trace_stop"() : () -> ()
    %231 = vector.broadcast %12 : vector<1x1x8xf32> to vector<1x8x8xf32>
    %232 = arith.addf %230, %231 : vector<1x8x8xf32>
    %cst_72 = arith.constant dense<0xFF800000> : vector<1x8xf32>
    %233 = vector.multi_reduction <maximumf>, %232, %cst_72 [2] : vector<1x8x8xf32> to vector<1x8xf32>
    %234 = vector.shape_cast %233 : vector<1x8xf32> to vector<1x8x1xf32>
    %235 = vector.broadcast %234 : vector<1x8x1xf32> to vector<1x8x8xf32>
    %236 = arith.subf %232, %235 : vector<1x8x8xf32>
    %237 = math.exp %236 : vector<1x8x8xf32>
    %cst_73 = arith.constant dense<0.000000e+00> : vector<1x8xf32>
    %238 = vector.multi_reduction <add>, %237, %cst_73 [2] : vector<1x8x8xf32> to vector<1x8xf32>
    %239 = vector.shape_cast %238 : vector<1x8xf32> to vector<1x8x1xf32>
    %240 = vector.broadcast %239 : vector<1x8x1xf32> to vector<1x8x8xf32>
    %241 = arith.divf %237, %240 : vector<1x8x8xf32>
    %242 = arith.truncf %241 : vector<1x8x8xf32> to vector<1x8x8xbf16>
    %243 = arith.truncf %227 : vector<1x8x16xf32> to vector<1x8x16xbf16>
    "tpu.trace_start"() <{level = 10 : i32, message = "bqk,bkd->bqd"}> : () -> ()
    %cst_74 = arith.constant dense<0.000000e+00> : vector<1x8x16xf32>
    %244 = tpu.matmul %242, %243, %cst_74 {dimension_numbers = #tpu.dot_dimension_numbers<[2], [1], [1], [2], [0, 0, 0, 1, 1, 2], [0], [0]>} : vector<1x8x8xbf16>, vector<1x8x16xbf16>, vector<1x8x16xf32> -> vector<1x8x16xf32>
    "tpu.trace_stop"() : () -> ()
    %245 = vector.shape_cast %244 : vector<1x8x16xf32> to vector<8x16xf32>
    %246 = tpu.concatenate %221, %245 in 1 : vector<8x16xf32>, vector<8x16xf32> -> vector<8x32xf32>
    %247 = arith.truncf %246 : vector<8x32xf32> to vector<8x32xbf16>
    %c1_75 = arith.constant 1 : index
    %c0_76 = arith.constant 0 : index
    %c0_77 = arith.constant 0 : index
    %248 = vector.load %arg7[%c1_75, %c0_76, %c0_77] : memref<2x32x32xbf16, #tpu.memory_space<vmem>>, vector<1x32x32xbf16>
    %249 = vector.shape_cast %248 : vector<1x32x32xbf16> to vector<32x32xbf16>
    %cst_78 = arith.constant dense<0.000000e+00> : vector<8x32xf32>
    %250 = tpu.matmul %247, %249, %cst_78 {dimension_numbers = #tpu.dot_dimension_numbers<[1], [0], [0], [1], [0, 0, 1, 1], [], []>} : vector<8x32xbf16>, vector<32x32xbf16>, vector<8x32xf32> -> vector<8x32xf32>
    %251 = vector.broadcast %163 : vector<1x32xf32> to vector<8x32xf32>
    %252 = arith.addf %250, %251 : vector<8x32xf32>
    %253 = arith.addf %157, %252 : vector<8x32xf32>
    %cst_79 = arith.constant dense<0.000000e+00> : vector<8xf32>
    %254 = vector.multi_reduction <add>, %253, %cst_79 [1] : vector<8x32xf32> to vector<8xf32>
    %255 = vector.shape_cast %254 : vector<8xf32> to vector<8x1xf32>
    %cst_80 = arith.constant 3.200000e+01 : f32
    %256 = vector.broadcast %cst_80 : f32 to vector<8x1xf32>
    %257 = arith.divf %255, %256 : vector<8x1xf32>
    %258 = vector.broadcast %257 : vector<8x1xf32> to vector<8x32xf32>
    %259 = arith.subf %253, %258 : vector<8x32xf32>
    %260 = arith.mulf %259, %259 : vector<8x32xf32>
    %cst_81 = arith.constant dense<0.000000e+00> : vector<8xf32>
    %261 = vector.multi_reduction <add>, %260, %cst_81 [1] : vector<8x32xf32> to vector<8xf32>
    %262 = vector.shape_cast %261 : vector<8xf32> to vector<8x1xf32>
    %cst_82 = arith.constant 3.200000e+01 : f32
    %263 = vector.broadcast %cst_82 : f32 to vector<8x1xf32>
    %264 = arith.divf %262, %263 : vector<8x1xf32>
    %cst_83 = arith.constant 9.99999997E-7 : f32
    %265 = vector.broadcast %cst_83 : f32 to vector<8x1xf32>
    %266 = arith.addf %264, %265 : vector<8x1xf32>
    %267 = math.rsqrt %266 : vector<8x1xf32>
    %268 = vector.broadcast %267 : vector<8x1xf32> to vector<8x32xf32>
    %269 = arith.mulf %259, %268 : vector<8x32xf32>
    %270 = vector.broadcast %165 : vector<1x32xf32> to vector<8x32xf32>
    %271 = arith.mulf %269, %270 : vector<8x32xf32>
    %272 = vector.broadcast %167 : vector<1x32xf32> to vector<8x32xf32>
    %273 = arith.addf %271, %272 : vector<8x32xf32>
    %274 = arith.truncf %273 : vector<8x32xf32> to vector<8x32xbf16>
    %c1_84 = arith.constant 1 : index
    %c0_85 = arith.constant 0 : index
    %c0_86 = arith.constant 0 : index
    %275 = vector.load %arg8[%c1_84, %c0_85, %c0_86] : memref<2x32x128xbf16, #tpu.memory_space<vmem>>, vector<1x32x128xbf16>
    %276 = vector.shape_cast %275 : vector<1x32x128xbf16> to vector<32x128xbf16>
    %cst_87 = arith.constant dense<0.000000e+00> : vector<8x128xf32>
    %277 = tpu.matmul %274, %276, %cst_87 {dimension_numbers = #tpu.dot_dimension_numbers<[1], [0], [0], [1], [0, 0, 1, 1], [], []>} : vector<8x32xbf16>, vector<32x128xbf16>, vector<8x128xf32> -> vector<8x128xf32>
    %c1_88 = arith.constant 1 : index
    %c0_89 = arith.constant 0 : index
    %c0_90 = arith.constant 0 : index
    %278 = vector.load %arg9[%c1_88, %c0_89, %c0_90] : memref<2x1x128xf32, #tpu.memory_space<vmem>>, vector<1x1x128xf32>
    %279 = vector.shape_cast %278 : vector<1x1x128xf32> to vector<1x128xf32>
    %280 = vector.broadcast %279 : vector<1x128xf32> to vector<8x128xf32>
    %281 = arith.addf %277, %280 : vector<8x128xf32>
    %282 = arith.mulf %281, %281 : vector<8x128xf32>
    %283 = arith.mulf %281, %282 : vector<8x128xf32>
    %cst_91 = arith.constant 4.471500e-02 : f32
    %284 = vector.broadcast %cst_91 : f32 to vector<8x128xf32>
    %285 = arith.mulf %284, %283 : vector<8x128xf32>
    %286 = arith.addf %281, %285 : vector<8x128xf32>
    %cst_92 = arith.constant 0.797884583 : f32
    %287 = vector.broadcast %cst_92 : f32 to vector<8x128xf32>
    %288 = arith.mulf %287, %286 : vector<8x128xf32>
    %289 = math.tanh %288 : vector<8x128xf32>
    %cst_93 = arith.constant 1.000000e+00 : f32
    %290 = vector.broadcast %cst_93 : f32 to vector<8x128xf32>
    %291 = arith.addf %290, %289 : vector<8x128xf32>
    %cst_94 = arith.constant 5.000000e-01 : f32
    %292 = vector.broadcast %cst_94 : f32 to vector<8x128xf32>
    %293 = arith.mulf %292, %291 : vector<8x128xf32>
    %294 = arith.mulf %281, %293 : vector<8x128xf32>
    %295 = arith.truncf %294 : vector<8x128xf32> to vector<8x128xbf16>
    %c1_95 = arith.constant 1 : index
    %c0_96 = arith.constant 0 : index
    %c0_97 = arith.constant 0 : index
    %296 = vector.load %arg10[%c1_95, %c0_96, %c0_97] : memref<2x128x32xbf16, #tpu.memory_space<vmem>>, vector<1x128x32xbf16>
    %297 = vector.shape_cast %296 : vector<1x128x32xbf16> to vector<128x32xbf16>
    %cst_98 = arith.constant dense<0.000000e+00> : vector<8x32xf32>
    %298 = tpu.matmul %295, %297, %cst_98 {dimension_numbers = #tpu.dot_dimension_numbers<[1], [0], [0], [1], [0, 0, 1, 1], [], []>} : vector<8x128xbf16>, vector<128x32xbf16>, vector<8x32xf32> -> vector<8x32xf32>
    %299 = vector.broadcast %169 : vector<1x32xf32> to vector<8x32xf32>
    %300 = arith.addf %298, %299 : vector<8x32xf32>
    %301 = arith.addf %253, %300 : vector<8x32xf32>
    %302 = vector.shape_cast %301 : vector<8x32xf32> to vector<1x8x32xf32>
    %303 = vector.extract_strided_slice %302 {offsets = [0, 0, 0], sizes = [1, 1, 32], strides = [1, 1, 1]} : vector<1x8x32xf32> to vector<1x1x32xf32>
    %304 = vector.shape_cast %303 : vector<1x1x32xf32> to vector<1x32xf32>
    %c0_99 = arith.constant 0 : index
    %c0_100 = arith.constant 0 : index
    %305 = vector.load %arg11[%c0_99, %c0_100] : memref<2x32xf32, #tpu.memory_space<vmem>>, vector<1x32xf32>
    %c1_101 = arith.constant 1 : index
    %c0_102 = arith.constant 0 : index
    %306 = vector.load %arg11[%c1_101, %c0_102] : memref<2x32xf32, #tpu.memory_space<vmem>>, vector<1x32xf32>
    %cst_103 = arith.constant dense<0.000000e+00> : vector<1xf32>
    %307 = vector.multi_reduction <add>, %304, %cst_103 [1] : vector<1x32xf32> to vector<1xf32>
    %308 = vector.shape_cast %307 : vector<1xf32> to vector<1x1xf32>
    %cst_104 = arith.constant 3.200000e+01 : f32
    %309 = vector.broadcast %cst_104 : f32 to vector<1x1xf32>
    %310 = arith.divf %308, %309 : vector<1x1xf32>
    %311 = vector.broadcast %310 : vector<1x1xf32> to vector<1x32xf32>
    %312 = arith.subf %304, %311 : vector<1x32xf32>
    %313 = arith.mulf %312, %312 : vector<1x32xf32>
    %cst_105 = arith.constant dense<0.000000e+00> : vector<1xf32>
    %314 = vector.multi_reduction <add>, %313, %cst_105 [1] : vector<1x32xf32> to vector<1xf32>
    %315 = vector.shape_cast %314 : vector<1xf32> to vector<1x1xf32>
    %cst_106 = arith.constant 3.200000e+01 : f32
    %316 = vector.broadcast %cst_106 : f32 to vector<1x1xf32>
    %317 = arith.divf %315, %316 : vector<1x1xf32>
    %cst_107 = arith.constant 9.99999997E-7 : f32
    %318 = vector.broadcast %cst_107 : f32 to vector<1x1xf32>
    %319 = arith.addf %317, %318 : vector<1x1xf32>
    %320 = math.rsqrt %319 : vector<1x1xf32>
    %321 = vector.broadcast %320 : vector<1x1xf32> to vector<1x32xf32>
    %322 = arith.mulf %312, %321 : vector<1x32xf32>
    %323 = arith.mulf %322, %305 : vector<1x32xf32>
    %324 = arith.addf %323, %306 : vector<1x32xf32>
    %325 = arith.truncf %324 : vector<1x32xf32> to vector<1x32xbf16>
    %c0_108 = arith.constant 0 : index
    %c0_109 = arith.constant 0 : index
    %326 = vector.load %arg12[%c0_108, %c0_109] : memref<32x48xbf16, #tpu.memory_space<vmem>>, vector<32x48xbf16>
    %cst_110 = arith.constant dense<0.000000e+00> : vector<1x48xf32>
    %327 = tpu.matmul %325, %326, %cst_110 {dimension_numbers = #tpu.dot_dimension_numbers<[1], [0], [0], [1], [0, 0, 1, 1], [], []>} : vector<1x32xbf16>, vector<32x48xbf16>, vector<1x48xf32> -> vector<1x48xf32>
    %c0_111 = arith.constant 0 : index
    %c0_112 = arith.constant 0 : index
    %328 = vector.load %arg13[%c0_111, %c0_112] : memref<1x48xf32, #tpu.memory_space<vmem>>, vector<1x48xf32>
    %329 = arith.addf %327, %328 : vector<1x48xf32>
    %330 = vector.shape_cast %329 : vector<1x48xf32> to vector<1x1x48xf32>
    %c0_113 = arith.constant 0 : index
    %c0_114 = arith.constant 0 : index
    %c0_115 = arith.constant 0 : index
    %331 = vector.load %arg14[%c0_113, %c0_114, %c0_115] : memref<1x1x48xf32, #tpu.memory_space<vmem>>, vector<1x1x48xf32>
    tpu.vector_store %arg14[%c0_113, %c0_114, %c0_115], %330 {strides = array<i32>} : memref<1x1x48xf32, #tpu.memory_space<vmem>>, vector<1x1x48xf32>,
    return
  }
  func.func @transform_0(%arg0: i32) -> (i32, i32, i32) {
    %c0_i32 = arith.constant 0 : i32
    %c0_i32_0 = arith.constant 0 : i32
    %c0_i32_1 = arith.constant 0 : i32
    return %arg0, %c0_i32, %c0_i32_0 : i32, i32, i32
  }
  func.func @transform_1(%arg0: i32) -> (i32, i32) {
    %c0_i32 = arith.constant 0 : i32
    %c0_i32_0 = arith.constant 0 : i32
    %c0_i32_1 = arith.constant 0 : i32
    return %c0_i32, %c0_i32_0 : i32, i32
  }
  func.func @transform_2(%arg0: i32) -> (i32, i32, i32) {
    %c0_i32 = arith.constant 0 : i32
    %c0_i32_0 = arith.constant 0 : i32
    %c0_i32_1 = arith.constant 0 : i32
    %c0_i32_2 = arith.constant 0 : i32
    return %c0_i32, %c0_i32_0, %c0_i32_1 : i32, i32, i32
  }
  func.func @transform_3(%arg0: i32) -> (i32, i32, i32) {
    %c0_i32 = arith.constant 0 : i32
    %c0_i32_0 = arith.constant 0 : i32
    %c0_i32_1 = arith.constant 0 : i32
    %c0_i32_2 = arith.constant 0 : i32
    return %c0_i32, %c0_i32_0, %c0_i32_1 : i32, i32, i32
  }
  func.func @transform_4(%arg0: i32) -> (i32, i32, i32) {
    %c0_i32 = arith.constant 0 : i32
    %c0_i32_0 = arith.constant 0 : i32
    %c0_i32_1 = arith.constant 0 : i32
    %c0_i32_2 = arith.constant 0 : i32
    return %c0_i32, %c0_i32_0, %c0_i32_1 : i32, i32, i32
  }
  func.func @transform_5(%arg0: i32) -> (i32, i32, i32) {
    %c0_i32 = arith.constant 0 : i32
    %c0_i32_0 = arith.constant 0 : i32
    %c0_i32_1 = arith.constant 0 : i32
    %c0_i32_2 = arith.constant 0 : i32
    return %c0_i32, %c0_i32_0, %c0_i32_1 : i32, i32, i32
  }
  func.func @transform_6(%arg0: i32) -> (i32, i32, i32) {
    %c0_i32 = arith.constant 0 : i32
    %c0_i32_0 = arith.constant 0 : i32
    %c0_i32_1 = arith.constant 0 : i32
    %c0_i32_2 = arith.constant 0 : i32
    return %c0_i32, %c0_i32_0, %c0_i32_1 : i32, i32, i32
  }
  func.func @transform_7(%arg0: i32) -> (i32, i32, i32) {
    %c0_i32 = arith.constant 0 : i32
    %c0_i32_0 = arith.constant 0 : i32
    %c0_i32_1 = arith.constant 0 : i32
    %c0_i32_2 = arith.constant 0 : i32
    return %c0_i32, %c0_i32_0, %c0_i32_1 : i32, i32, i32
  }
  func.func @transform_8(%arg0: i32) -> (i32, i32, i32) {
    %c0_i32 = arith.constant 0 : i32
    %c0_i32_0 = arith.constant 0 : i32
    %c0_i32_1 = arith.constant 0 : i32
    %c0_i32_2 = arith.constant 0 : i32
    return %c0_i32, %c0_i32_0, %c0_i32_1 : i32, i32, i32
  }
  func.func @transform_9(%arg0: i32) -> (i32, i32, i32) {
    %c0_i32 = arith.constant 0 : i32
    %c0_i32_0 = arith.constant 0 : i32
    %c0_i32_1 = arith.constant 0 : i32
    %c0_i32_2 = arith.constant 0 : i32
    return %c0_i32, %c0_i32_0, %c0_i32_1 : i32, i32, i32
  }
  func.func @transform_10(%arg0: i32) -> (i32, i32) {
    %c0_i32 = arith.constant 0 : i32
    %c0_i32_0 = arith.constant 0 : i32
    %c0_i32_1 = arith.constant 0 : i32
    return %c0_i32, %c0_i32_0 : i32, i32
  }
  func.func @transform_11(%arg0: i32) -> (i32, i32) {
    %c0_i32 = arith.constant 0 : i32
    %c0_i32_0 = arith.constant 0 : i32
    %c0_i32_1 = arith.constant 0 : i32
    return %c0_i32, %c0_i32_0 : i32, i32
  }
  func.func @transform_12(%arg0: i32) -> (i32, i32) {
    %c0_i32 = arith.constant 0 : i32
    %c0_i32_0 = arith.constant 0 : i32
    %c0_i32_1 = arith.constant 0 : i32
    return %c0_i32, %c0_i32_0 : i32, i32
  }
  func.func @transform_13(%arg0: i32) -> (i32, i32, i32) {
    %c0_i32 = arith.constant 0 : i32
    %c0_i32_0 = arith.constant 0 : i32
    %c0_i32_1 = arith.constant 0 : i32
    return %arg0, %c0_i32, %c0_i32_0 : i32, i32, i32
  }
}

</mosaic_0001>

<llo_original>
// kernel: image_encoder_forward.1
$region0: #{image_encoder_forward.1}
  #allocation0 [shape = 'u32[]', space=smem, size = 0x4, offset = 0x4, fixed_abs, tag = 'smem constant byte address 0x4 - core index']
  #allocation1 [shape = 'u32[144,128]{1,0:T(1,128)}', space=vmem, size = 0x12000, scoped, tag = 'internal scratch']
  %s0 = inlined_call_operand.vmem [shape: bf16[2,8,768], index: 0, kind: input, shape index: {}]
  %s1 = inlined_call_operand.vmem [shape: bf16[768,32], index: 1, kind: input, shape index: {}]
  %s2 = inlined_call_operand.vmem [shape: f32[1,8,32], index: 2, kind: input, shape index: {}]
  %s3 = inlined_call_operand.vmem [shape: f32[2,6,32], index: 3, kind: input, shape index: {}]
  %s4 = inlined_call_operand.vmem [shape: bf16[2,32,96], index: 4, kind: input, shape index: {}]
  %s5 = inlined_call_operand.vmem [shape: f32[2,1,96], index: 5, kind: input, shape index: {}]
  %s6 = inlined_call_operand.vmem [shape: bf16[2,32,32], index: 6, kind: input, shape index: {}]
  %s7 = inlined_call_operand.vmem [shape: bf16[2,32,128], index: 7, kind: input, shape index: {}]
  %s8 = inlined_call_operand.vmem [shape: f32[2,1,128], index: 8, kind: input, shape index: {}]
  %s9 = inlined_call_operand.vmem [shape: bf16[2,128,32], index: 9, kind: input, shape index: {}]
  %s10 = inlined_call_operand.vmem [shape: f32[2,32], index: 10, kind: input, shape index: {}]
  %s11 = inlined_call_operand.vmem [shape: bf16[32,48], index: 11, kind: input, shape index: {}]
  %s12 = inlined_call_operand.vmem [shape: f32[1,48], index: 12, kind: input, shape index: {}]
  %s13 = inlined_call_operand.hbm [shape: f32[2,1,48], index: 13, kind: output, shape index: {}]
  %s14 = sld [smem:[#allocation0]]
  $region85: #{image_encoder_forward.1} parent=0
    _
  %s16 = ssub.s32 1, %s14
  %s17 = scalar_select 0, %s16, %s14
  $region1: #{image_encoder_forward.1} parent=0
    #allocation2 [shape = 'u8[1024]{0}', space=vmem, size = 0x400, scoped, tag = 'output window, operand 0']
    #allocation3 [shape = 's32[2]{0}', space=sflag, size = 0x8, scoped, tag = 'scoped memory for image_encoder_forward.1']
    %18 = vsyncpa [#allocation3], 0
    %s19 = scalar_lea.sflag [#allocation3], 1
    %20 = vsyncpa %s19, 0
    loop: start=0, step=1, limit=4
    $region2: #{image_encoder_forward.1} parent=1 // loop_pre_header
      _
    $region3: #{image_encoder_forward.1} parent=1 // loop_header
      %s22 = sphi 0, %s26
      %p23 = scmp.ge.s32.totalorder %s22, 4
      %s32 = sphi 0, %s34
      %s35 = sphi 0, %s32
      %s36 = sphi 0, %s35
      %s52 = sphi 0, %s36
      %s56 = sphi 0, %s56
      %s58 = sphi 0, %s56
      %s59 = sphi 0, %s58
      %s73 = sphi 0, %s59
      %s77 = sphi 0, %s77
      %s79 = sphi 0, %s77
      %s80 = sphi 0, %s79
      %s94 = sphi 0, %s80
      %s98 = sphi 0, %s98
      %s100 = sphi 0, %s98
      %s101 = sphi 0, %s100
      %s115 = sphi 0, %s101
      %s119 = sphi 0, %s119
      %s121 = sphi 0, %s119
      %s122 = sphi 0, %s121
      %s136 = sphi 0, %s122
      %s140 = sphi 0, %s140
      %s142 = sphi 0, %s140
      %s143 = sphi 0, %s142
      %s157 = sphi 0, %s143
      %s161 = sphi 0, %s161
      %s163 = sphi 0, %s161
      %s164 = sphi 0, %s163
      %s178 = sphi 0, %s164
      %s182 = sphi 0, %s182
      %s184 = sphi 0, %s182
      %s185 = sphi 0, %s184
      %s199 = sphi 0, %s185
      %s203 = sphi 0, %s203
      %s205 = sphi 0, %s203
      %s206 = sphi 0, %s205
      %s220 = sphi 0, %s206
      %s224 = sphi 0, %s224
      %s226 = sphi 0, %s224
      %s227 = sphi 0, %s226
      %s241 = sphi 0, %s227
      %s245 = sphi 0, %s245
      %s247 = sphi 0, %s245
      %s248 = sphi 0, %s247
      %s262 = sphi 0, %s248
      %s266 = sphi 0, %s266
      %s268 = sphi 0, %s266
      %s269 = sphi 0, %s268
      %s283 = sphi 0, %s269
      %s287 = sphi 0, %s287
      %s289 = sphi 0, %s287
      %s290 = sphi 0, %s289
      %s304 = sphi 0, %s290
      %s310 = sphi 0, %s312
      %s313 = sphi 0, %s310
      %s314 = sphi 0, %s313
      %s330 = sphi 0, %s314
    $region4: #{image_encoder_forward.1} parent=1 // loop_header_branch
      %25 = sbr.rel (%p23) target = $region8
    $region5: #{image_encoder_forward.1} parent=1 // loop_body
      %s27 = ssub.s32 %s22, 1
      %s28 = ssub.s32 %s22, 2
      %s29 = sadd.s32 %s22, 1
      %s30 = ssub.s32 %s22, %s29
      %p31 = scmp.eq.s32.totalorder %s30, 0
      %s33 = sadd.s32 %s32, 1
      %s34 = scalar_select %p31, %s32, %s33
      %p37 = pneg %p31
      %p38 = scmp.eq.s32.totalorder %s22, 1
      %p39 = por %p37, %p38
      %p40 = scmp.ne.s32.totalorder %s32, %s35
      %p41 = scmp.eq.s32.totalorder %s22, 0
      %p42 = por %p40, %p41
      %p43 = scmp.ne.s32.totalorder %s32, %s35
      %p44 = scmp.eq.s32.totalorder %s27, 1
      %p45 = por %p43, %p44
      %p46 = scmp.ne.s32.totalorder %s35, %s36
      %p47 = scmp.eq.s32.totalorder %s27, 0
      %p48 = por %p46, %p47
      %p49 = scmp.ne.s32.totalorder %s35, %s36
      %p50 = scmp.eq.s32.totalorder %s28, 1
      %p51 = por %p49, %p50
      %p53 = scmp.ne.s32.totalorder %s36, %s52
      %p54 = scmp.eq.s32.totalorder %s28, 0
      %p55 = por %p53, %p54
      %s57 = sadd.s32 %s56, 1
      %p60 = scmp.eq.s32.totalorder %s22, 1
      %p61 = scmp.ne.s32.totalorder %s56, %s58
      %p62 = scmp.eq.s32.totalorder %s22, 0
      %p63 = por %p61, %p62
      %p64 = scmp.ne.s32.totalorder %s56, %s58
      %p65 = scmp.eq.s32.totalorder %s27, 1
      %p66 = por %p64, %p65
      %p67 = scmp.ne.s32.totalorder %s58, %s59
      %p68 = scmp.eq.s32.totalorder %s27, 0
      %p69 = por %p67, %p68
      %p70 = scmp.ne.s32.totalorder %s58, %s59
      %p71 = scmp.eq.s32.totalorder %s28, 1
      %p72 = por %p70, %p71
      %p74 = scmp.ne.s32.totalorder %s59, %s73
      %p75 = scmp.eq.s32.totalorder %s28, 0
      %p76 = por %p74, %p75
      %s78 = sadd.s32 %s77, 1
      %p81 = scmp.eq.s32.totalorder %s22, 1
      %p82 = scmp.ne.s32.totalorder %s77, %s79
      %p83 = scmp.eq.s32.totalorder %s22, 0
      %p84 = por %p82, %p83
      %p85 = scmp.ne.s32.totalorder %s77, %s79
      %p86 = scmp.eq.s32.totalorder %s27, 1
      %p87 = por %p85, %p86
      %p88 = scmp.ne.s32.totalorder %s79, %s80
      %p89 = scmp.eq.s32.totalorder %s27, 0
      %p90 = por %p88, %p89
      %p91 = scmp.ne.s32.totalorder %s79, %s80
      %p92 = scmp.eq.s32.totalorder %s28, 1
      %p93 = por %p91, %p92
      %p95 = scmp.ne.s32.totalorder %s80, %s94
      %p96 = scmp.eq.s32.totalorder %s28, 0
      %p97 = por %p95, %p96
      %s99 = sadd.s32 %s98, 1
      %p102 = scmp.eq.s32.totalorder %s22, 1
      %p103 = scmp.ne.s32.totalorder %s98, %s100
      %p104 = scmp.eq.s32.totalorder %s22, 0
      %p105 = por %p103, %p104
      %p106 = scmp.ne.s32.totalorder %s98, %s100
      %p107 = scmp.eq.s32.totalorder %s27, 1
      %p108 = por %p106, %p107
      %p109 = scmp.ne.s32.totalorder %s100, %s101
      %p110 = scmp.eq.s32.totalorder %s27, 0
      %p111 = por %p109, %p110
      %p112 = scmp.ne.s32.totalorder %s100, %s101
      %p113 = scmp.eq.s32.totalorder %s28, 1
      %p114 = por %p112, %p113
      %p116 = scmp.ne.s32.totalorder %s101, %s115
      %p117 = scmp.eq.s32.totalorder %s28, 0
      %p118 = por %p116, %p117
      %s120 = sadd.s32 %s119, 1
      %p123 = scmp.eq.s32.totalorder %s22, 1
      %p124 = scmp.ne.s32.totalorder %s119, %s121
      %p125 = scmp.eq.s32.totalorder %s22, 0
      %p126 = por %p124, %p125
      %p127 = scmp.ne.s32.totalorder %s119, %s121
      %p128 = scmp.eq.s32.totalorder %s27, 1
      %p129 = por %p127, %p128
      %p130 = scmp.ne.s32.totalorder %s121, %s122
      %p131 = scmp.eq.s32.totalorder %s27, 0
      %p132 = por %p130, %p131
      %p133 = scmp.ne.s32.totalorder %s121, %s122
      %p134 = scmp.eq.s32.totalorder %s28, 1
      %p135 = por %p133, %p134
      %p137 = scmp.ne.s32.totalorder %s122, %s136
      %p138 = scmp.eq.s32.totalorder %s28, 0
      %p139 = por %p137, %p138
      %s141 = sadd.s32 %s140, 1
      %p144 = scmp.eq.s32.totalorder %s22, 1
      %p145 = scmp.ne.s32.totalorder %s140, %s142
      %p146 = scmp.eq.s32.totalorder %s22, 0
      %p147 = por %p145, %p146
      %p148 = scmp.ne.s32.totalorder %s140, %s142
      %p149 = scmp.eq.s32.totalorder %s27, 1
      %p150 = por %p148, %p149
      %p151 = scmp.ne.s32.totalorder %s142, %s143
      %p152 = scmp.eq.s32.totalorder %s27, 0
      %p153 = por %p151, %p152
      %p154 = scmp.ne.s32.totalorder %s142, %s143
      %p155 = scmp.eq.s32.totalorder %s28, 1
      %p156 = por %p154, %p155
      %p158 = scmp.ne.s32.totalorder %s143, %s157
      %p159 = scmp.eq.s32.totalorder %s28, 0
      %p160 = por %p158, %p159
      %s162 = sadd.s32 %s161, 1
      %p165 = scmp.eq.s32.totalorder %s22, 1
      %p166 = scmp.ne.s32.totalorder %s161, %s163
      %p167 = scmp.eq.s32.totalorder %s22, 0
      %p168 = por %p166, %p167
      %p169 = scmp.ne.s32.totalorder %s161, %s163
      %p170 = scmp.eq.s32.totalorder %s27, 1
      %p171 = por %p169, %p170
      %p172 = scmp.ne.s32.totalorder %s163, %s164
      %p173 = scmp.eq.s32.totalorder %s27, 0
      %p174 = por %p172, %p173
      %p175 = scmp.ne.s32.totalorder %s163, %s164
      %p176 = scmp.eq.s32.totalorder %s28, 1
      %p177 = por %p175, %p176
      %p179 = scmp.ne.s32.totalorder %s164, %s178
      %p180 = scmp.eq.s32.totalorder %s28, 0
      %p181 = por %p179, %p180
      %s183 = sadd.s32 %s182, 1
      %p186 = scmp.eq.s32.totalorder %s22, 1
      %p187 = scmp.ne.s32.totalorder %s182, %s184
      %p188 = scmp.eq.s32.totalorder %s22, 0
      %p189 = por %p187, %p188
      %p190 = scmp.ne.s32.totalorder %s182, %s184
      %p191 = scmp.eq.s32.totalorder %s27, 1
      %p192 = por %p190, %p191
      %p193 = scmp.ne.s32.totalorder %s184, %s185
      %p194 = scmp.eq.s32.totalorder %s27, 0
      %p195 = por %p193, %p194
      %p196 = scmp.ne.s32.totalorder %s184, %s185
      %p197 = scmp.eq.s32.totalorder %s28, 1
      %p198 = por %p196, %p197
      %p200 = scmp.ne.s32.totalorder %s185, %s199
      %p201 = scmp.eq.s32.totalorder %s28, 0
      %p202 = por %p200, %p201
      %s204 = sadd.s32 %s203, 1
      %p207 = scmp.eq.s32.totalorder %s22, 1
      %p208 = scmp.ne.s32.totalorder %s203, %s205
      %p209 = scmp.eq.s32.totalorder %s22, 0
      %p210 = por %p208, %p209
      %p211 = scmp.ne.s32.totalorder %s203, %s205
      %p212 = scmp.eq.s32.totalorder %s27, 1
      %p213 = por %p211, %p212
      %p214 = scmp.ne.s32.totalorder %s205, %s206
      %p215 = scmp.eq.s32.totalorder %s27, 0
      %p216 = por %p214, %p215
      %p217 = scmp.ne.s32.totalorder %s205, %s206
      %p218 = scmp.eq.s32.totalorder %s28, 1
      %p219 = por %p217, %p218
      %p221 = scmp.ne.s32.totalorder %s206, %s220
      %p222 = scmp.eq.s32.totalorder %s28, 0
      %p223 = por %p221, %p222
      %s225 = sadd.s32 %s224, 1
      %p228 = scmp.eq.s32.totalorder %s22, 1
      %p229 = scmp.ne.s32.totalorder %s224, %s226
      %p230 = scmp.eq.s32.totalorder %s22, 0
      %p231 = por %p229, %p230
      %p232 = scmp.ne.s32.totalorder %s224, %s226
      %p233 = scmp.eq.s32.totalorder %s27, 1
      %p234 = por %p232, %p233
      %p235 = scmp.ne.s32.totalorder %s226, %s227
      %p236 = scmp.eq.s32.totalorder %s27, 0
      %p237 = por %p235, %p236
      %p238 = scmp.ne.s32.totalorder %s226, %s227
      %p239 = scmp.eq.s32.totalorder %s28, 1
      %p240 = por %p238, %p239
      %p242 = scmp.ne.s32.totalorder %s227, %s241
      %p243 = scmp.eq.s32.totalorder %s28, 0
      %p244 = por %p242, %p243
      %s246 = sadd.s32 %s245, 1
      %p249 = scmp.eq.s32.totalorder %s22, 1
      %p250 = scmp.ne.s32.totalorder %s245, %s247
      %p251 = scmp.eq.s32.totalorder %s22, 0
      %p252 = por %p250, %p251
      %p253 = scmp.ne.s32.totalorder %s245, %s247
      %p254 = scmp.eq.s32.totalorder %s27, 1
      %p255 = por %p253, %p254
      %p256 = scmp.ne.s32.totalorder %s247, %s248
      %p257 = scmp.eq.s32.totalorder %s27, 0
      %p258 = por %p256, %p257
      %p259 = scmp.ne.s32.totalorder %s247, %s248
      %p260 = scmp.eq.s32.totalorder %s28, 1
      %p261 = por %p259, %p260
      %p263 = scmp.ne.s32.totalorder %s248, %s262
      %p264 = scmp.eq.s32.totalorder %s28, 0
      %p265 = por %p263, %p264
      %s267 = sadd.s32 %s266, 1
      %p270 = scmp.eq.s32.totalorder %s22, 1
      %p271 = scmp.ne.s32.totalorder %s266, %s268
      %p272 = scmp.eq.s32.totalorder %s22, 0
      %p273 = por %p271, %p272
      %p274 = scmp.ne.s32.totalorder %s266, %s268
      %p275 = scmp.eq.s32.totalorder %s27, 1
      %p276 = por %p274, %p275
      %p277 = scmp.ne.s32.totalorder %s268, %s269
      %p278 = scmp.eq.s32.totalorder %s27, 0
      %p279 = por %p277, %p278
      %p280 = scmp.ne.s32.totalorder %s268, %s269
      %p281 = scmp.eq.s32.totalorder %s28, 1
      %p282 = por %p280, %p281
      %p284 = scmp.ne.s32.totalorder %s269, %s283
      %p285 = scmp.eq.s32.totalorder %s28, 0
      %p286 = por %p284, %p285
      %s288 = sadd.s32 %s287, 1
      %p291 = scmp.eq.s32.totalorder %s22, 1
      %p292 = scmp.ne.s32.totalorder %s287, %s289
      %p293 = scmp.eq.s32.totalorder %s22, 0
      %p294 = por %p292, %p293
      %p295 = scmp.ne.s32.totalorder %s287, %s289
      %p296 = scmp.eq.s32.totalorder %s27, 1
      %p297 = por %p295, %p296
      %p298 = scmp.ne.s32.totalorder %s289, %s290
      %p299 = scmp.eq.s32.totalorder %s27, 0
      %p300 = por %p298, %p299
      %p301 = scmp.ne.s32.totalorder %s289, %s290
      %p302 = scmp.eq.s32.totalorder %s28, 1
      %p303 = por %p301, %p302
      %p305 = scmp.ne.s32.totalorder %s290, %s304
      %p306 = scmp.eq.s32.totalorder %s28, 0
      %p307 = por %p305, %p306
      %s308 = ssub.s32 %s22, %s29
      %p309 = scmp.eq.s32.totalorder %s308, 0
      %s311 = sadd.s32 %s310, 1
      %s312 = scalar_select %p309, %s310, %s311
      %p315 = pneg %p309
      %p316 = scmp.eq.s32.totalorder %s22, 1
      %p317 = por %p315, %p316
      %p318 = scmp.ne.s32.totalorder %s310, %s313
      %p319 = scmp.eq.s32.totalorder %s22, 0
      %p320 = por %p318, %p319
      %p321 = scmp.ne.s32.totalorder %s310, %s313
      %p322 = scmp.eq.s32.totalorder %s27, 1
      %p323 = por %p321, %p322
      %p324 = scmp.ne.s32.totalorder %s313, %s314
      %p325 = scmp.eq.s32.totalorder %s27, 0
      %p326 = por %p324, %p325
      %p327 = scmp.ne.s32.totalorder %s313, %s314
      %p328 = scmp.eq.s32.totalorder %s28, 1
      %p329 = por %p327, %p328
      %p331 = scmp.ne.s32.totalorder %s314, %s330
      %p332 = scmp.eq.s32.totalorder %s28, 0
      %p333 = por %p331, %p332
      %p334 = scmp.le.s32.totalorder 1, %s22
      %p335 = scmp.lt.s32.totalorder %s22, 3
      %p336 = pnand %p334, %p335
      %p337 = pneg %p336
      // Predicated region
      $region9: #{image_encoder_forward.1} parent=5 // pred_check
        _
      $region10: #{image_encoder_forward.1} parent=5 // pred_check_branch
        %339 = sbr.rel (%p336) target = $region12
      $region11: #{image_encoder_forward.1} parent=5 // pred_region
        %s340 = ssub.s32 %s22, 1
        // Predicated region
        $region13: #{image_encoder_forward.1} parent=11 // pred_check
          %p341 = pneg %p69
        $region14: #{image_encoder_forward.1} parent=11 // pred_check_branch
          %343 = sbr.rel (%p341) target = $region16
        $region15: #{image_encoder_forward.1} parent=11 // pred_region
          _
        $region16: #{image_encoder_forward.1} parent=11 // pred_fallthru
          _
        // Predicated region
        $region17: #{image_encoder_forward.1} parent=11 // pred_check
          %p344 = pneg %p90
        $region18: #{image_encoder_forward.1} parent=11 // pred_check_branch
          %346 = sbr.rel (%p344) target = $region20
        $region19: #{image_encoder_forward.1} parent=11 // pred_region
          _
        $region20: #{image_encoder_forward.1} parent=11 // pred_fallthru
          _
        // Predicated region
        $region21: #{image_encoder_forward.1} parent=11 // pred_check
          %p347 = pneg %p111
        $region22: #{image_encoder_forward.1} parent=11 // pred_check_branch
          %349 = sbr.rel (%p347) target = $region24
        $region23: #{image_encoder_forward.1} parent=11 // pred_region
          _
        $region24: #{image_encoder_forward.1} parent=11 // pred_fallthru
          _
        // Predicated region
        $region25: #{image_encoder_forward.1} parent=11 // pred_check
          %p350 = pneg %p132
        $region26: #{image_encoder_forward.1} parent=11 // pred_check_branch
          %352 = sbr.rel (%p350) target = $region28
        $region27: #{image_encoder_forward.1} parent=11 // pred_region
          _
        $region28: #{image_encoder_forward.1} parent=11 // pred_fallthru
          _
        // Predicated region
        $region29: #{image_encoder_forward.1} parent=11 // pred_check
          %p353 = pneg %p153
        $region30: #{image_encoder_forward.1} parent=11 // pred_check_branch
          %355 = sbr.rel (%p353) target = $region32
        $region31: #{image_encoder_forward.1} parent=11 // pred_region
          _
        $region32: #{image_encoder_forward.1} parent=11 // pred_fallthru
          _
        // Predicated region
        $region33: #{image_encoder_forward.1} parent=11 // pred_check
          %p356 = pneg %p174
        $region34: #{image_encoder_forward.1} parent=11 // pred_check_branch
          %358 = sbr.rel (%p356) target = $region36
        $region35: #{image_encoder_forward.1} parent=11 // pred_region
          _
        $region36: #{image_encoder_forward.1} parent=11 // pred_fallthru
          _
        // Predicated region
        $region37: #{image_encoder_forward.1} parent=11 // pred_check
          %p359 = pneg %p195
        $region38: #{image_encoder_forward.1} parent=11 // pred_check_branch
          %361 = sbr.rel (%p359) target = $region40
        $region39: #{image_encoder_forward.1} parent=11 // pred_region
          _
        $region40: #{image_encoder_forward.1} parent=11 // pred_fallthru
          _
        // Predicated region
        $region41: #{image_encoder_forward.1} parent=11 // pred_check
          %p362 = pneg %p216
        $region42: #{image_encoder_forward.1} parent=11 // pred_check_branch
          %364 = sbr.rel (%p362) target = $region44
        $region43: #{image_encoder_forward.1} parent=11 // pred_region
          _
        $region44: #{image_encoder_forward.1} parent=11 // pred_fallthru
          _
        // Predicated region
        $region45: #{image_encoder_forward.1} parent=11 // pred_check
          %p365 = pneg %p237
        $region46: #{image_encoder_forward.1} parent=11 // pred_check_branch
          %367 = sbr.rel (%p365) target = $region48
        $region47: #{image_encoder_forward.1} parent=11 // pred_region
          _
        $region48: #{image_encoder_forward.1} parent=11 // pred_fallthru
          _
        // Predicated region
        $region49: #{image_encoder_forward.1} parent=11 // pred_check
          %p368 = pneg %p258
        $region50: #{image_encoder_forward.1} parent=11 // pred_check_branch
          %370 = sbr.rel (%p368) target = $region52
        $region51: #{image_encoder_forward.1} parent=11 // pred_region
          _
        $region52: #{image_encoder_forward.1} parent=11 // pred_fallthru
          _
        // Predicated region
        $region53: #{image_encoder_forward.1} parent=11 // pred_check
          %p371 = pneg %p279
        $region54: #{image_encoder_forward.1} parent=11 // pred_check_branch
          %373 = sbr.rel (%p371) target = $region56
        $region55: #{image_encoder_forward.1} parent=11 // pred_region
          _
        $region56: #{image_encoder_forward.1} parent=11 // pred_fallthru
          _
        // Predicated region
        $region57: #{image_encoder_forward.1} parent=11 // pred_check
          %p374 = pneg %p300
        $region58: #{image_encoder_forward.1} parent=11 // pred_check_branch
          %376 = sbr.rel (%p374) target = $region60
        $region59: #{image_encoder_forward.1} parent=11 // pred_region
          _
        $region60: #{image_encoder_forward.1} parent=11 // pred_fallthru
          _
      $region12: #{image_encoder_forward.1} parent=5 // pred_fallthru
        _
      %p377 = scmp.lt.s32.totalorder %s22, 2
      // Predicated region
      $region61: #{image_encoder_forward.1} parent=5 // pred_check
        %p378 = pneg %p377
      $region62: #{image_encoder_forward.1} parent=5 // pred_check_branch
        %380 = sbr.rel (%p378) target = $region64
      $region63: #{image_encoder_forward.1} parent=5 // pred_region
        // Predicated region
        $region65: #{image_encoder_forward.1} parent=63 // pred_check
          %p381 = pneg %p42
        $region66: #{image_encoder_forward.1} parent=63 // pred_check_branch
          %383 = sbr.rel (%p381) target = $region68
        $region67: #{image_encoder_forward.1} parent=63 // pred_region
          %p384 = scmp.lt.s32.totalorder %s22, 1
          %s385 = scalar_select %p384, %s22, 1
          %s386 = smul.addr %s385, 6
          %s387 = smul.addr %s386, 4
          %s388 = scalar_lea.vmem %s0, %s387
        $region68: #{image_encoder_forward.1} parent=63 // pred_fallthru
          _
      $region64: #{image_encoder_forward.1} parent=5 // pred_fallthru
        _
      %p389 = scmp.le.s32.totalorder 1, %s22
      %p390 = scmp.lt.s32.totalorder %s22, 3
      %p391 = pnand %p389, %p390
      %p392 = pneg %p391
      // Predicated region
      $region69: #{image_encoder_forward.1} parent=5 // pred_check
        _
      $region70: #{image_encoder_forward.1} parent=5 // pred_check_branch
        %394 = sbr.rel (%p391) target = $region72
      $region71: #{image_encoder_forward.1} parent=5 // pred_region
        %s395 = ssub.s32 %s22, 1
        %p396 = scmp.lt.s32.totalorder %s27, 1
        %s397 = scalar_select %p396, %s27, 1
        %s398 = smul.addr %s397, 6
        %s399 = smul.addr %s398, 4
        %s400 = scalar_lea.vmem %s0, %s399
        %p401 = pneg %p48
        %p402 = pneg %p45
        %p403 = pneg %p69
        %p404 = pneg %p66
        %p405 = pneg %p90
        %p406 = pneg %p87
        %p407 = pneg %p111
        %p408 = pneg %p108
        %p409 = pneg %p132
        %p410 = pneg %p129
        %p411 = pneg %p153
        %p412 = pneg %p150
        %p413 = pneg %p174
        %p414 = pneg %p171
        %p415 = pneg %p195
        %p416 = pneg %p192
        %p417 = pneg %p216
        %p418 = pneg %p213
        %p419 = pneg %p237
        %p420 = pneg %p234
        %p421 = pneg %p258
        %p422 = pneg %p255
        %p423 = pneg %p279
        %p424 = pneg %p276
        %p425 = pneg %p300
        %p426 = pneg %p297
        %p427 = pneg %p326
        %p428 = pneg %p323
        %s429 = sand.u32 %s313, 1
        %s430 = scalar_lea.sflag [#allocation3], %s429
        %s431 = sand.u32 %s313, 1
        %s432 = scalar_lea.vmem [#allocation2], %s431
        %p433 = scmp.lt.s32.totalorder %s27, 1
        %s434 = scalar_select %p433, %s27, 1
        %s435 = smul.addr %s434, 6
        %s436 = smul.addr %s435, 4
        %s437 = scalar_lea.vmem %s0, %s436
        %v439 = vld [vmem:[%s437] sm:$0xff]
        %v440 = vld [vmem:[%s437 + $0x8] sm:$0xff]
        %v441 = vld [vmem:[%s437 + $0x10] sm:$0xff]
        %v442 = vld [vmem:[%s1] sm:$0xf]
        %v443 = vld [vmem:[%s1 + $0x4] sm:$0xf]
        %v444 = vld [vmem:[%s1 + $0x8] sm:$0xf]
        %v445 = vld [vmem:[%s1 + $0xc] sm:$0xf]
        %v446 = vld [vmem:[%s1 + $0x10] sm:$0xf]
        %v447 = vld [vmem:[%s1 + $0x14] sm:$0xf]
        %v448 = vld [vmem:[%s1 + $0x18] sm:$0xf]
        %v449 = vld [vmem:[%s1 + $0x1c] sm:$0xf]
        %v450 = vld [vmem:[%s1 + $0x20] sm:$0xf]
        %v451 = vld [vmem:[%s1 + $0x24] sm:$0xf]
        %v452 = vld [vmem:[%s1 + $0x28] sm:$0xf]
        %v453 = vld [vmem:[%s1 + $0x2c] sm:$0xf]
        %v454 = vld [vmem:[%s1 + $0x30] sm:$0xf]
        %v455 = vld [vmem:[%s1 + $0x34] sm:$0xf]
        %v456 = vld [vmem:[%s1 + $0x38] sm:$0xf]
        %v457 = vld [vmem:[%s1 + $0x3c] sm:$0xf]
        %v458 = vld [vmem:[%s1 + $0x40] sm:$0xf]
        %v459 = vld [vmem:[%s1 + $0x44] sm:$0xf]
        %v460 = vld [vmem:[%s1 + $0x48] sm:$0xf]
        %v461 = vld [vmem:[%s1 + $0x4c] sm:$0xf]
        %v462 = vld [vmem:[%s1 + $0x50] sm:$0xf]
        %v463 = vld [vmem:[%s1 + $0x54] sm:$0xf]
        %v464 = vld [vmem:[%s1 + $0x58] sm:$0xf]
        %v465 = vld [vmem:[%s1 + $0x5c] sm:$0xf]
        %v466 = vld [vmem:[%s1 + $0x60] sm:$0xf]
        %v467 = vld [vmem:[%s1 + $0x64] sm:$0xf]
        %v468 = vld [vmem:[%s1 + $0x68] sm:$0xf]
        %v469 = vld [vmem:[%s1 + $0x6c] sm:$0xf]
        %v470 = vld [vmem:[%s1 + $0x70] sm:$0xf]
        %v471 = vld [vmem:[%s1 + $0x74] sm:$0xf]
        %v472 = vld [vmem:[%s1 + $0x78] sm:$0xf]
        %v473 = vld [vmem:[%s1 + $0x7c] sm:$0xf]
        %v474 = vld [vmem:[%s1 + $0x80] sm:$0xf]
        %v475 = vld [vmem:[%s1 + $0x84] sm:$0xf]
        %v476 = vld [vmem:[%s1 + $0x88] sm:$0xf]
        %v477 = vld [vmem:[%s1 + $0x8c] sm:$0xf]
        %v478 = vld [vmem:[%s1 + $0x90] sm:$0xf]
        %v479 = vld [vmem:[%s1 + $0x94] sm:$0xf]
        %v480 = vld [vmem:[%s1 + $0x98] sm:$0xf]
        %v481 = vld [vmem:[%s1 + $0x9c] sm:$0xf]
        %v482 = vld [vmem:[%s1 + $0xa0] sm:$0xf]
        %v483 = vld [vmem:[%s1 + $0xa4] sm:$0xf]
        %v484 = vld [vmem:[%s1 + $0xa8] sm:$0xf]
        %v485 = vld [vmem:[%s1 + $0xac] sm:$0xf]
        %v486 = vld [vmem:[%s1 + $0xb0] sm:$0xf]
        %v487 = vld [vmem:[%s1 + $0xb4] sm:$0xf]
        %v488 = vld [vmem:[%s1 + $0xb8] sm:$0xf]
        %v489 = vld [vmem:[%s1 + $0xbc] sm:$0xf]
        %v490 = vld [vmem:[%s1 + $0xc0] sm:$0xf]
        %v491 = vld [vmem:[%s1 + $0xc4] sm:$0xf]
        %v492 = vld [vmem:[%s1 + $0xc8] sm:$0xf]
        %v493 = vld [vmem:[%s1 + $0xcc] sm:$0xf]
        %v494 = vld [vmem:[%s1 + $0xd0] sm:$0xf]
        %v495 = vld [vmem:[%s1 + $0xd4] sm:$0xf]
        %v496 = vld [vmem:[%s1 + $0xd8] sm:$0xf]
        %v497 = vld [vmem:[%s1 + $0xdc] sm:$0xf]
        %v498 = vld [vmem:[%s1 + $0xe0] sm:$0xf]
        %v499 = vld [vmem:[%s1 + $0xe4] sm:$0xf]
        %v500 = vld [vmem:[%s1 + $0xe8] sm:$0xf]
        %v501 = vld [vmem:[%s1 + $0xec] sm:$0xf]
        %v502 = vld [vmem:[%s1 + $0xf0] sm:$0xf]
        %v503 = vld [vmem:[%s1 + $0xf4] sm:$0xf]
        %v504 = vld [vmem:[%s1 + $0xf8] sm:$0xf]
        %v505 = vld [vmem:[%s1 + $0xfc] sm:$0xf]
        %v506 = vld [vmem:[%s1 + $0x100] sm:$0xf]
        %v507 = vld [vmem:[%s1 + $0x104] sm:$0xf]
        %v508 = vld [vmem:[%s1 + $0x108] sm:$0xf]
        %v509 = vld [vmem:[%s1 + $0x10c] sm:$0xf]
        %v510 = vld [vmem:[%s1 + $0x110] sm:$0xf]
        %v511 = vld [vmem:[%s1 + $0x114] sm:$0xf]
        %v512 = vld [vmem:[%s1 + $0x118] sm:$0xf]
        %v513 = vld [vmem:[%s1 + $0x11c] sm:$0xf]
        %v514 = vld [vmem:[%s1 + $0x120] sm:$0xf]
        %v515 = vld [vmem:[%s1 + $0x124] sm:$0xf]
        %v516 = vld [vmem:[%s1 + $0x128] sm:$0xf]
        %v517 = vld [vmem:[%s1 + $0x12c] sm:$0xf]
        %v518 = vld [vmem:[%s1 + $0x130] sm:$0xf]
        %v519 = vld [vmem:[%s1 + $0x134] sm:$0xf]
        %v520 = vld [vmem:[%s1 + $0x138] sm:$0xf]
        %v521 = vld [vmem:[%s1 + $0x13c] sm:$0xf]
        %v522 = vld [vmem:[%s1 + $0x140] sm:$0xf]
        %v523 = vld [vmem:[%s1 + $0x144] sm:$0xf]
        %v524 = vld [vmem:[%s1 + $0x148] sm:$0xf]
        %v525 = vld [vmem:[%s1 + $0x14c] sm:$0xf]
        %v526 = vld [vmem:[%s1 + $0x150] sm:$0xf]
        %v527 = vld [vmem:[%s1 + $0x154] sm:$0xf]
        %v528 = vld [vmem:[%s1 + $0x158] sm:$0xf]
        %v529 = vld [vmem:[%s1 + $0x15c] sm:$0xf]
        %v530 = vld [vmem:[%s1 + $0x160] sm:$0xf]
        %v531 = vld [vmem:[%s1 + $0x164] sm:$0xf]
        %v532 = vld [vmem:[%s1 + $0x168] sm:$0xf]
        %v533 = vld [vmem:[%s1 + $0x16c] sm:$0xf]
        %v534 = vld [vmem:[%s1 + $0x170] sm:$0xf]
        %v535 = vld [vmem:[%s1 + $0x174] sm:$0xf]
        %v536 = vld [vmem:[%s1 + $0x178] sm:$0xf]
        %v537 = vld [vmem:[%s1 + $0x17c] sm:$0xf]
        %v538 = vld [vmem:[%s2] sm:$0xff]
        %v542 = vunpack.c.l.b16 %v439
        %v543 = vunpack.c.h.b16 %v439
        %v544 = vunpack.c.l.b16 %v440
        %v545 = vunpack.c.h.b16 %v440
        %v546 = vunpack.c.l.b16 %v441
        %v547 = vunpack.c.h.b16 %v441
        %v548 = vpack.c.b16 %v542, %v542
        %v549 = vpack.c.b16 %v543, %v543
        %v550 = vpack.c.b16 %v544, %v544
        %v551 = vpack.c.b16 %v545, %v545
        %v552 = vpack.c.b16 %v546, %v546
        %v553 = vpack.c.b16 %v547, %v547
        %v656 = vunpack.c.l.b16 %v442
        %v657 = vunpack.c.l.b16 %v443
        %v658 = vunpack.c.l.b16 %v444
        %v659 = vunpack.c.l.b16 %v445
        %v660 = vunpack.c.l.b16 %v446
        %v661 = vunpack.c.l.b16 %v447
        %v662 = vunpack.c.l.b16 %v448
        %v663 = vunpack.c.l.b16 %v449
        %v664 = vunpack.c.l.b16 %v450
        %v665 = vunpack.c.l.b16 %v451
        %v666 = vunpack.c.l.b16 %v452
        %v667 = vunpack.c.l.b16 %v453
        %v668 = vunpack.c.l.b16 %v454
        %v669 = vunpack.c.l.b16 %v455
        %v670 = vunpack.c.l.b16 %v456
        %v671 = vunpack.c.l.b16 %v457
        %v672 = vunpack.c.l.b16 %v458
        %v673 = vunpack.c.l.b16 %v459
        %v674 = vunpack.c.l.b16 %v460
        %v675 = vunpack.c.l.b16 %v461
        %v676 = vunpack.c.l.b16 %v462
        %v677 = vunpack.c.l.b16 %v463
        %v678 = vunpack.c.l.b16 %v464
        %v679 = vunpack.c.l.b16 %v465
        %v680 = vunpack.c.l.b16 %v466
        %v681 = vunpack.c.l.b16 %v467
        %v682 = vunpack.c.l.b16 %v468
        %v683 = vunpack.c.l.b16 %v469
        %v684 = vunpack.c.l.b16 %v470
        %v685 = vunpack.c.l.b16 %v471
        %v686 = vunpack.c.l.b16 %v472
        %v687 = vunpack.c.l.b16 %v473
        %v688 = vunpack.c.l.b16 %v474
        %v689 = vunpack.c.l.b16 %v475
        %v690 = vunpack.c.l.b16 %v476
        %v691 = vunpack.c.l.b16 %v477
        %v692 = vunpack.c.l.b16 %v478
        %v693 = vunpack.c.l.b16 %v479
        %v694 = vunpack.c.l.b16 %v480
        %v695 = vunpack.c.l.b16 %v481
        %v696 = vunpack.c.l.b16 %v482
        %v697 = vunpack.c.l.b16 %v483
        %v698 = vunpack.c.l.b16 %v484
        %v699 = vunpack.c.l.b16 %v485
        %v700 = vunpack.c.l.b16 %v486
        %v701 = vunpack.c.l.b16 %v487
        %v702 = vunpack.c.l.b16 %v488
        %v703 = vunpack.c.l.b16 %v489
        %v704 = vunpack.c.l.b16 %v490
        %v705 = vunpack.c.l.b16 %v491
        %v706 = vunpack.c.l.b16 %v492
        %v707 = vunpack.c.l.b16 %v493
        %v708 = vunpack.c.l.b16 %v494
        %v709 = vunpack.c.l.b16 %v495
        %v710 = vunpack.c.l.b16 %v496
        %v711 = vunpack.c.l.b16 %v497
        %v712 = vunpack.c.l.b16 %v498
        %v713 = vunpack.c.l.b16 %v499
        %v714 = vunpack.c.l.b16 %v500
        %v715 = vunpack.c.l.b16 %v501
        %v716 = vunpack.c.l.b16 %v502
        %v717 = vunpack.c.l.b16 %v503
        %v718 = vunpack.c.l.b16 %v504
        %v719 = vunpack.c.l.b16 %v505
        %v720 = vunpack.c.l.b16 %v506
        %v721 = vunpack.c.l.b16 %v507
        %v722 = vunpack.c.l.b16 %v508
        %v723 = vunpack.c.l.b16 %v509
        %v724 = vunpack.c.l.b16 %v510
        %v725 = vunpack.c.l.b16 %v511
        %v726 = vunpack.c.l.b16 %v512
        %v727 = vunpack.c.l.b16 %v513
        %v728 = vunpack.c.l.b16 %v514
        %v729 = vunpack.c.l.b16 %v515
        %v730 = vunpack.c.l.b16 %v516
        %v731 = vunpack.c.l.b16 %v517
        %v732 = vunpack.c.l.b16 %v518
        %v733 = vunpack.c.l.b16 %v519
        %v734 = vunpack.c.l.b16 %v520
        %v735 = vunpack.c.l.b16 %v521
        %v736 = vunpack.c.l.b16 %v522
        %v737 = vunpack.c.l.b16 %v523
        %v738 = vunpack.c.l.b16 %v524
        %v739 = vunpack.c.l.b16 %v525
        %v740 = vunpack.c.l.b16 %v526
        %v741 = vunpack.c.l.b16 %v527
        %v742 = vunpack.c.l.b16 %v528
        %v743 = vunpack.c.l.b16 %v529
        %v744 = vunpack.c.l.b16 %v530
        %v745 = vunpack.c.l.b16 %v531
        %v746 = vunpack.c.l.b16 %v532
        %v747 = vunpack.c.l.b16 %v533
        %v748 = vunpack.c.l.b16 %v534
        %v749 = vunpack.c.l.b16 %v535
        %v750 = vunpack.c.l.b16 %v536
        %v751 = vunpack.c.l.b16 %v537
        %v752 = vpack.c.b16 %v657, %v656
        %v753 = vpack.c.b16 %v659, %v658
        %v754 = vpack.c.b16 %v661, %v660
        %v755 = vpack.c.b16 %v663, %v662
        %v756 = vpack.c.b16 %v665, %v664
        %v757 = vpack.c.b16 %v667, %v666
        %v758 = vpack.c.b16 %v669, %v668
        %v759 = vpack.c.b16 %v671, %v670
        %v760 = vpack.c.b16 %v673, %v672
        %v761 = vpack.c.b16 %v675, %v674
        %v762 = vpack.c.b16 %v677, %v676
        %v763 = vpack.c.b16 %v679, %v678
        %v764 = vpack.c.b16 %v681, %v680
        %v765 = vpack.c.b16 %v683, %v682
        %v766 = vpack.c.b16 %v685, %v684
        %v767 = vpack.c.b16 %v687, %v686
        %v768 = vpack.c.b16 %v689, %v688
        %v769 = vpack.c.b16 %v691, %v690
        %v770 = vpack.c.b16 %v693, %v692
        %v771 = vpack.c.b16 %v695, %v694
        %v772 = vpack.c.b16 %v697, %v696
        %v773 = vpack.c.b16 %v699, %v698
        %v774 = vpack.c.b16 %v701, %v700
        %v775 = vpack.c.b16 %v703, %v702
        %v776 = vpack.c.b16 %v705, %v704
        %v777 = vpack.c.b16 %v707, %v706
        %v778 = vpack.c.b16 %v709, %v708
        %v779 = vpack.c.b16 %v711, %v710
        %v780 = vpack.c.b16 %v713, %v712
        %v781 = vpack.c.b16 %v715, %v714
        %v782 = vpack.c.b16 %v717, %v716
        %v783 = vpack.c.b16 %v719, %v718
        %v784 = vpack.c.b16 %v721, %v720
        %v785 = vpack.c.b16 %v723, %v722
        %v786 = vpack.c.b16 %v725, %v724
        %v787 = vpack.c.b16 %v727, %v726
        %v788 = vpack.c.b16 %v729, %v728
        %v789 = vpack.c.b16 %v731, %v730
        %v790 = vpack.c.b16 %v733, %v732
        %v791 = vpack.c.b16 %v735, %v734
        %v792 = vpack.c.b16 %v737, %v736
        %v793 = vpack.c.b16 %v739, %v738
        %v794 = vpack.c.b16 %v741, %v740
        %v795 = vpack.c.b16 %v743, %v742
        %v796 = vpack.c.b16 %v745, %v744
        %v797 = vpack.c.b16 %v747, %v746
        %v798 = vpack.c.b16 %v749, %v748
        %v799 = vpack.c.b16 %v751, %v750
        %848 = vmatprep.subr.bf16.mxu0 0
        %849 = vmatpush1.bf16.msra.mxu0 %v752
        %850 = vmatprep.subr.bf16.mxu0 0
        %851 = vmatpush1.bf16.msra.mxu0 %v753
        %852 = vmatprep.subr.bf16.mxu0 0
        %853 = vmatpush1.bf16.msra.mxu0 %v754
        %854 = vmatprep.subr.bf16.mxu0 0
        %855 = vmatpush1.bf16.msra.mxu0 %v755
        %856 = vmatprep.subr.bf16.mxu0 0
        %857 = vmatpush1.bf16.msra.mxu0 %v756
        %858 = vmatprep.subr.bf16.mxu0 0
        %859 = vmatpush1.bf16.msra.mxu0 %v757
        %860 = vmatprep.subr.bf16.mxu0 0
        %861 = vmatpush1.bf16.msra.mxu0 %v758
        %862 = vmatprep.subr.bf16.mxu0 0
        %863 = vmatpush1.bf16.msra.mxu0 %v759
        %864 = vmatprep.subr.bf16.mxu0 0
        %865 = vmatpush1.bf16.msra.mxu0 %v760
        %866 = vmatprep.subr.bf16.mxu0 0
        %867 = vmatpush1.bf16.msra.mxu0 %v761
        %868 = vmatprep.subr.bf16.mxu0 0
        %869 = vmatpush1.bf16.msra.mxu0 %v762
        %870 = vmatprep.subr.bf16.mxu0 0
        %871 = vmatpush1.bf16.msra.mxu0 %v763
        %872 = vmatprep.subr.bf16.mxu0 0
        %873 = vmatpush1.bf16.msra.mxu0 %v764
        %874 = vmatprep.subr.bf16.mxu0 0
        %875 = vmatpush1.bf16.msra.mxu0 %v765
        %876 = vmatprep.subr.bf16.mxu0 0
        %877 = vmatpush1.bf16.msra.mxu0 %v766
        %878 = vmatprep.subr.bf16.mxu0 0
        %879 = vmatpush1.bf16.msra.mxu0 %v767
        %880 = vmatprep.mubr.bf16.mxu0 %v549
        %881 = vmatmul.mubr.bf16.gmra.mrb[0].mxu0 %v548
        %v882 = vpop.f32.mrb[0].mxu0
        %v883 = vadd.f32 %v538, %v882
        %v884 = vpop.f32.mrb[0].mxu0
        %v885 = vpop.f32.mrb[0].mxu0
        %v886 = vpop.f32.mrb[0].mxu0
        %887 = vdwg.mxu0
        %888 = vmatprep.subr.bf16.mxu0 0
        %889 = vmatpush1.bf16.msra.mxu0 %v768
        %890 = vmatprep.subr.bf16.mxu0 0
        %891 = vmatpush1.bf16.msra.mxu0 %v769
        %892 = vmatprep.subr.bf16.mxu0 0
        %893 = vmatpush1.bf16.msra.mxu0 %v770
        %894 = vmatprep.subr.bf16.mxu0 0
        %895 = vmatpush1.bf16.msra.mxu0 %v771
        %896 = vmatprep.subr.bf16.mxu0 0
        %897 = vmatpush1.bf16.msra.mxu0 %v772
        %898 = vmatprep.subr.bf16.mxu0 0
        %899 = vmatpush1.bf16.msra.mxu0 %v773
        %900 = vmatprep.subr.bf16.mxu0 0
        %901 = vmatpush1.bf16.msra.mxu0 %v774
        %902 = vmatprep.subr.bf16.mxu0 0
        %903 = vmatpush1.bf16.msra.mxu0 %v775
        %904 = vmatprep.subr.bf16.mxu0 0
        %905 = vmatpush1.bf16.msra.mxu0 %v776
        %906 = vmatprep.subr.bf16.mxu0 0
        %907 = vmatpush1.bf16.msra.mxu0 %v777
        %908 = vmatprep.subr.bf16.mxu0 0
        %909 = vmatpush1.bf16.msra.mxu0 %v778
        %910 = vmatprep.subr.bf16.mxu0 0
        %911 = vmatpush1.bf16.msra.mxu0 %v779
        %912 = vmatprep.subr.bf16.mxu0 0
        %913 = vmatpush1.bf16.msra.mxu0 %v780
        %914 = vmatprep.subr.bf16.mxu0 0
        %915 = vmatpush1.bf16.msra.mxu0 %v781
        %916 = vmatprep.subr.bf16.mxu0 0
        %917 = vmatpush1.bf16.msra.mxu0 %v782
        %918 = vmatprep.subr.bf16.mxu0 0
        %919 = vmatpush1.bf16.msra.mxu0 %v783
        %920 = vmatprep.mubr.bf16.mxu0 %v551
        %921 = vmatmul.mubr.bf16.gmra.mrb[0].mxu0 %v550
        %v922 = vpop.f32.mrb[0].mxu0
        %v923 = vadd.f32 %v883, %v922
        %v924 = vpop.f32.mrb[0].mxu0
        %v925 = vpop.f32.mrb[0].mxu0
        %v926 = vpop.f32.mrb[0].mxu0
        %927 = vdwg.mxu0
        %928 = vmatprep.subr.bf16.mxu0 0
        %929 = vmatpush1.bf16.msra.mxu0 %v784
        %930 = vmatprep.subr.bf16.mxu0 0
        %931 = vmatpush1.bf16.msra.mxu0 %v785
        %932 = vmatprep.subr.bf16.mxu0 0
        %933 = vmatpush1.bf16.msra.mxu0 %v786
        %934 = vmatprep.subr.bf16.mxu0 0
        %935 = vmatpush1.bf16.msra.mxu0 %v787
        %936 = vmatprep.subr.bf16.mxu0 0
        %937 = vmatpush1.bf16.msra.mxu0 %v788
        %938 = vmatprep.subr.bf16.mxu0 0
        %939 = vmatpush1.bf16.msra.mxu0 %v789
        %940 = vmatprep.subr.bf16.mxu0 0
        %941 = vmatpush1.bf16.msra.mxu0 %v790
        %942 = vmatprep.subr.bf16.mxu0 0
        %943 = vmatpush1.bf16.msra.mxu0 %v791
        %944 = vmatprep.subr.bf16.mxu0 0
        %945 = vmatpush1.bf16.msra.mxu0 %v792
        %946 = vmatprep.subr.bf16.mxu0 0
        %947 = vmatpush1.bf16.msra.mxu0 %v793
        %948 = vmatprep.subr.bf16.mxu0 0
        %949 = vmatpush1.bf16.msra.mxu0 %v794
        %950 = vmatprep.subr.bf16.mxu0 0
        %951 = vmatpush1.bf16.msra.mxu0 %v795
        %952 = vmatprep.subr.bf16.mxu0 0
        %953 = vmatpush1.bf16.msra.mxu0 %v796
        %954 = vmatprep.subr.bf16.mxu0 0
        %955 = vmatpush1.bf16.msra.mxu0 %v797
        %956 = vmatprep.subr.bf16.mxu0 0
        %957 = vmatpush1.bf16.msra.mxu0 %v798
        %958 = vmatprep.subr.bf16.mxu0 0
        %959 = vmatpush1.bf16.msra.mxu0 %v799
        %960 = vmatprep.mubr.bf16.mxu0 %v553
        %961 = vmatmul.mubr.bf16.gmra.mrb[0].mxu0 %v552
        %v962 = vpop.f32.mrb[0].mxu0
        %v963 = vadd.f32 %v923, %v962
        %v964 = vpop.f32.mrb[0].mxu0
        %v965 = vpop.f32.mrb[0].mxu0
        %v966 = vpop.f32.mrb[0].mxu0
        %967 = vdwg.mxu0
        %v968 = vlaneseq
        %v969 = vand.u32 %v968, 127
        %vm970 = vcmp.lt.s32.totalorder %v969, 5
        %v971 = vsel %vm970, 0.0, -1e+30
        %v972 = vld [vmem:[%s3] sm:$0x3f]
        %v973 = vld [vmem:[%s3 + $0x8] sm:$0x3f]
        %vm974 = vcmask 261120
        %v975 = vsel %vm974, %v963, 0.0
        %976 = vadd.xlane.f32.xlu0 %v975
        %v977 = vpop.xlane.xlu0 %976
        %v978 = vrcp.pop 32.0
        %v979 = vmul.f32 %v977, %v978
        %v980 = vsub.f32 %v963, %v979
        %v981 = vmul.f32 %v980, %v980
        %v982 = vsel %vm974, %v981, 0.0
        %983 = vadd.xlane.f32.xlu0 %v982
        %v984 = vpop.xlane.xlu0 %983
        %v985 = vmul.f32 %v984, %v978
        %v986 = vadd.f32 %v985, 1e-06
        %v987 = vrsqrt.pop %v986
        %v988 = vmul.f32 %v980, %v987
        %v989 = vlaneseq
        %v990 = vshrl.u32 %v989, 7
        %v991 = vsub.s32 0, %v990
        %v992 = vrot.slane %v972, %v991
        %v993 = vmul.f32 %v988, %v992
        %v994 = vlaneseq
        %v995 = vshrl.u32 %v994, 7
        %v996 = vsub.s32 1, %v995
        %v997 = vrot.slane %v972, %v996
        %v998 = vadd.f32 %v993, %v997
        %v999 = vpack.c.bf16 %v998, %v998
        %v1000 = vld [vmem:[%s4] sm:$0xf]
        %v1001 = vld [vmem:[%s4 + $0x4] sm:$0xf]
        %v1002 = vld [vmem:[%s4 + $0x8] sm:$0xf]
        %v1003 = vld [vmem:[%s4 + $0xc] sm:$0xf]
        %v1004 = vld [vmem:[%s5] sm:$0x1]
        %v1006 = vlaneseq
        %v1007 = vshrl.u32 %v1006, 7
        %v1008 = vsub.s32 0, %v1007
        %v1009 = vrot.slane %v1004, %v1008
        %v1015 = vunpack.c.l.b16 %v1000
        %v1016 = vunpack.c.l.b16 %v1001
        %v1017 = vunpack.c.l.b16 %v1002
        %v1018 = vunpack.c.l.b16 %v1003
        %v1019 = vpack.c.b16 %v1016, %v1015
        %v1020 = vpack.c.b16 %v1018, %v1017
        %v1024 = vsel %vm974, %v999, 0
        %1026 = vmatprep.subr.bf16.mxu0 0
        %1027 = vmatpush1.bf16.msra.mxu0 %v1019
        %1028 = vmatprep.subr.bf16.mxu0 0
        %1029 = vmatpush1.bf16.msra.mxu0 %v1020
        %1030 = vmatprep.subr.bf16.mxu0 0
        %1031 = vmatpush1.bf16.msra.mxu0 0
        %1032 = vmatprep.subr.bf16.mxu0 0
        %1033 = vmatpush1.bf16.msra.mxu0 0
        %1034 = vmatprep.subr.bf16.mxu0 0
        %1035 = vmatpush1.bf16.msra.mxu0 0
        %1036 = vmatprep.subr.bf16.mxu0 0
        %1037 = vmatpush1.bf16.msra.mxu0 0
        %1038 = vmatprep.subr.bf16.mxu0 0
        %1039 = vmatpush1.bf16.msra.mxu0 0
        %1040 = vmatprep.subr.bf16.mxu0 0
        %1041 = vmatpush1.bf16.msra.mxu0 0
        %1042 = vmatprep.subr.bf16.mxu0 0
        %1043 = vmatpush1.bf16.msra.mxu0 0
        %1044 = vmatprep.subr.bf16.mxu0 0
        %1045 = vmatpush1.bf16.msra.mxu0 0
        %1046 = vmatprep.subr.bf16.mxu0 0
        %1047 = vmatpush1.bf16.msra.mxu0 0
        %1048 = vmatprep.subr.bf16.mxu0 0
        %1049 = vmatpush1.bf16.msra.mxu0 0
        %1050 = vmatprep.subr.bf16.mxu0 0
        %1051 = vmatpush1.bf16.msra.mxu0 0
        %1052 = vmatprep.subr.bf16.mxu0 0
        %1053 = vmatpush1.bf16.msra.mxu0 0
        %1054 = vmatprep.subr.bf16.mxu0 0
        %1055 = vmatpush1.bf16.msra.mxu0 0
        %1056 = vmatprep.subr.bf16.mxu0 0
        %1057 = vmatpush1.bf16.msra.mxu0 0
        %1058 = vmatprep.mubr.bf16.mxu0 0
        %1059 = vmatmul.mubr.bf16.gmra.mrb[0].mxu0 %v1024
        %v1060 = vpop.f32.mrb[0].mxu0
        %v1061 = vadd.f32 %v1009, %v1060
        %v1062 = vpop.f32.mrb[0].mxu0
        %v1063 = vpop.f32.mrb[0].mxu0
        %v1064 = vpop.f32.mrb[0].mxu0
        %1065 = vdwg.mxu0
        %v1066 = vpack.c.bf16 %v1061, %v1061
        %1068 = vrot.lane.b32.xlu0 %v1066, 96
        %v1069 = vpop.permute.xlu0 %1068
        %vm1070 = vcmask 130048
        %v1072 = vsel %vm1070, %v1066, 0
        %v1075 = vsel %vm1070, %v1069, 0
        %1077 = vmatprep.subr.bf16.mxu0 0
        %1078 = vmatpush1.bf16.xpose.msra.mxu0 %v1075
        %1079 = vmatprep.subr.bf16.mxu0 0
        %1080 = vmatpush1.bf16.xpose.msra.mxu0 0
        %1081 = vmatprep.subr.bf16.mxu0 0
        %1082 = vmatpush1.bf16.xpose.msra.mxu0 0
        %1083 = vmatprep.subr.bf16.mxu0 0
        %1084 = vmatpush1.bf16.xpose.msra.mxu0 0
        %1085 = vmatprep.subr.bf16.mxu0 0
        %1086 = vmatpush1.bf16.xpose.msra.mxu0 0
        %1087 = vmatprep.subr.bf16.mxu0 0
        %1088 = vmatpush1.bf16.xpose.msra.mxu0 0
        %1089 = vmatprep.subr.bf16.mxu0 0
        %1090 = vmatpush1.bf16.xpose.msra.mxu0 0
        %1091 = vmatprep.subr.bf16.mxu0 0
        %1092 = vmatpush1.bf16.xpose.msra.mxu0 0
        %1093 = vmatprep.subr.bf16.mxu0 0
        %1094 = vmatpush1.bf16.xpose.msra.mxu0 0
        %1095 = vmatprep.subr.bf16.mxu0 0
        %1096 = vmatpush1.bf16.xpose.msra.mxu0 0
        %1097 = vmatprep.subr.bf16.mxu0 0
        %1098 = vmatpush1.bf16.xpose.msra.mxu0 0
        %1099 = vmatprep.subr.bf16.mxu0 0
        %1100 = vmatpush1.bf16.xpose.msra.mxu0 0
        %1101 = vmatprep.subr.bf16.mxu0 0
        %1102 = vmatpush1.bf16.xpose.msra.mxu0 0
        %1103 = vmatprep.subr.bf16.mxu0 0
        %1104 = vmatpush1.bf16.xpose.msra.mxu0 0
        %1105 = vmatprep.subr.bf16.mxu0 0
        %1106 = vmatpush1.bf16.xpose.msra.mxu0 0
        %1107 = vmatprep.subr.bf16.mxu0 0
        %1108 = vmatpush1.bf16.xpose.msra.mxu0 0
        %1109 = vmatprep.mubr.bf16.mxu0 0
        %1110 = vmatmul.mubr.bf16.gmra.mrb[0].mxu0 %v1072
        %v1111 = vpop.f32.mrb[0].mxu0
        %v1112 = vadd.f32 %v971, %v1111
        %v1113 = vpop.f32.mrb[0].mxu0
        %v1114 = vpop.f32.mrb[0].mxu0
        %v1115 = vpop.f32.mrb[0].mxu0
        %1116 = vdwg.mxu0
        %vm1117 = vcmask 64512
        %v1118 = vsel %vm1117, %v1112, -inf
        %1119 = vmax.xlane.f32.xlu0 %v1118
        %v1120 = vpop.xlane.xlu0 %1119
        %v1121 = vsub.f32 %v1112, %v1120
        %v1122 = vmul.f32 %v1121, 1.442695
        %v1123 = vpow.pop %v1122
        %v1124 = vsel %vm1117, %v1123, 0.0
        %1125 = vadd.xlane.f32.xlu0 %v1124
        %v1126 = vpop.xlane.xlu0 %1125
        %v1127 = vrcp.pop %v1126
        %v1128 = vmul.f32 %v1123, %v1127
        %v1129 = vpack.c.bf16 %v1128, %v1128
        %1130 = vrot.lane.b32.xlu0 %v1066, 64
        %v1131 = vpop.permute.xlu0 %1130
        %v1133 = vsel %vm1117, %v1129, 0
        %vm1135 = vcmask 1043456
        %v1137 = vsel %vm1135, %v1131, 0
        %1139 = vmatprep.subr.bf16.mxu0 0
        %1140 = vmatpush1.bf16.msra.mxu0 %v1137
        %1141 = vmatprep.subr.bf16.mxu0 0
        %1142 = vmatpush1.bf16.msra.mxu0 0
        %1143 = vmatprep.subr.bf16.mxu0 0
        %1144 = vmatpush1.bf16.msra.mxu0 0
        %1145 = vmatprep.subr.bf16.mxu0 0
        %1146 = vmatpush1.bf16.msra.mxu0 0
        %1147 = vmatprep.subr.bf16.mxu0 0
        %1148 = vmatpush1.bf16.msra.mxu0 0
        %1149 = vmatprep.subr.bf16.mxu0 0
        %1150 = vmatpush1.bf16.msra.mxu0 0
        %1151 = vmatprep.subr.bf16.mxu0 0
        %1152 = vmatpush1.bf16.msra.mxu0 0
        %1153 = vmatprep.subr.bf16.mxu0 0
        %1154 = vmatpush1.bf16.msra.mxu0 0
        %1155 = vmatprep.subr.bf16.mxu0 0
        %1156 = vmatpush1.bf16.msra.mxu0 0
        %1157 = vmatprep.subr.bf16.mxu0 0
        %1158 = vmatpush1.bf16.msra.mxu0 0
        %1159 = vmatprep.subr.bf16.mxu0 0
        %1160 = vmatpush1.bf16.msra.mxu0 0
        %1161 = vmatprep.subr.bf16.mxu0 0
        %1162 = vmatpush1.bf16.msra.mxu0 0
        %1163 = vmatprep.subr.bf16.mxu0 0
        %1164 = vmatpush1.bf16.msra.mxu0 0
        %1165 = vmatprep.subr.bf16.mxu0 0
        %1166 = vmatpush1.bf16.msra.mxu0 0
        %1167 = vmatprep.subr.bf16.mxu0 0
        %1168 = vmatpush1.bf16.msra.mxu0 0
        %1169 = vmatprep.subr.bf16.mxu0 0
        %1170 = vmatpush1.bf16.msra.mxu0 0
        %1171 = vmatprep.mubr.bf16.mxu0 0
        %1172 = vmatmul.mubr.bf16.gmra.mrb[0].mxu0 %v1133
        %v1173 = vpop.f32.mrb[0].mxu0
        %v1174 = vadd.f32 0.0, %v1173
        %v1175 = vpop.f32.mrb[0].mxu0
        %v1176 = vpop.f32.mrb[0].mxu0
        %v1177 = vpop.f32.mrb[0].mxu0
        %1178 = vdwg.mxu0
        %1179 = vrot.lane.b32.xlu0 %v1066, 112
        %v1180 = vpop.permute.xlu0 %1179
        %1181 = vrot.lane.b32.xlu0 %v1066, 80
        %v1182 = vpop.permute.xlu0 %1181
        %v1184 = vsel %vm1070, %v1180, 0
        %v1187 = vsel %vm1070, %v1182, 0
        %1189 = vmatprep.subr.bf16.mxu0 0
        %1190 = vmatpush1.bf16.xpose.msra.mxu0 %v1187
        %1191 = vmatprep.subr.bf16.mxu0 0
        %1192 = vmatpush1.bf16.xpose.msra.mxu0 0
        %1193 = vmatprep.subr.bf16.mxu0 0
        %1194 = vmatpush1.bf16.xpose.msra.mxu0 0
        %1195 = vmatprep.subr.bf16.mxu0 0
        %1196 = vmatpush1.bf16.xpose.msra.mxu0 0
        %1197 = vmatprep.subr.bf16.mxu0 0
        %1198 = vmatpush1.bf16.xpose.msra.mxu0 0
        %1199 = vmatprep.subr.bf16.mxu0 0
        %1200 = vmatpush1.bf16.xpose.msra.mxu0 0
        %1201 = vmatprep.subr.bf16.mxu0 0
        %1202 = vmatpush1.bf16.xpose.msra.mxu0 0
        %1203 = vmatprep.subr.bf16.mxu0 0
        %1204 = vmatpush1.bf16.xpose.msra.mxu0 0
        %1205 = vmatprep.subr.bf16.mxu0 0
        %1206 = vmatpush1.bf16.xpose.msra.mxu0 0
        %1207 = vmatprep.subr.bf16.mxu0 0
        %1208 = vmatpush1.bf16.xpose.msra.mxu0 0
        %1209 = vmatprep.subr.bf16.mxu0 0
        %1210 = vmatpush1.bf16.xpose.msra.mxu0 0
        %1211 = vmatprep.subr.bf16.mxu0 0
        %1212 = vmatpush1.bf16.xpose.msra.mxu0 0
        %1213 = vmatprep.subr.bf16.mxu0 0
        %1214 = vmatpush1.bf16.xpose.msra.mxu0 0
        %1215 = vmatprep.subr.bf16.mxu0 0
        %1216 = vmatpush1.bf16.xpose.msra.mxu0 0
        %1217 = vmatprep.subr.bf16.mxu0 0
        %1218 = vmatpush1.bf16.xpose.msra.mxu0 0
        %1219 = vmatprep.subr.bf16.mxu0 0
        %1220 = vmatpush1.bf16.xpose.msra.mxu0 0
        %1221 = vmatprep.mubr.bf16.mxu0 0
        %1222 = vmatmul.mubr.bf16.gmra.mrb[0].mxu0 %v1184
        %v1223 = vpop.f32.mrb[0].mxu0
        %v1224 = vadd.f32 %v971, %v1223
        %v1225 = vpop.f32.mrb[0].mxu0
        %v1226 = vpop.f32.mrb[0].mxu0
        %v1227 = vpop.f32.mrb[0].mxu0
        %1228 = vdwg.mxu0
        %v1229 = vsel %vm1117, %v1224, -inf
        %1230 = vmax.xlane.f32.xlu0 %v1229
        %v1231 = vpop.xlane.xlu0 %1230
        %v1232 = vsub.f32 %v1224, %v1231
        %v1233 = vmul.f32 %v1232, 1.442695
        %v1234 = vpow.pop %v1233
        %v1235 = vsel %vm1117, %v1234, 0.0
        %1236 = vadd.xlane.f32.xlu0 %v1235
        %v1237 = vpop.xlane.xlu0 %1236
        %v1238 = vrcp.pop %v1237
        %v1239 = vmul.f32 %v1234, %v1238
        %v1240 = vpack.c.bf16 %v1239, %v1239
        %1241 = vrot.lane.b32.xlu0 %v1066, 48
        %v1242 = vpop.permute.xlu0 %1241
        %v1244 = vsel %vm1117, %v1240, 0
        %v1247 = vsel %vm1135, %v1242, 0
        %1249 = vmatprep.subr.bf16.mxu0 0
        %1250 = vmatpush1.bf16.msra.mxu0 %v1247
        %1251 = vmatprep.subr.bf16.mxu0 0
        %1252 = vmatpush1.bf16.msra.mxu0 0
        %1253 = vmatprep.subr.bf16.mxu0 0
        %1254 = vmatpush1.bf16.msra.mxu0 0
        %1255 = vmatprep.subr.bf16.mxu0 0
        %1256 = vmatpush1.bf16.msra.mxu0 0
        %1257 = vmatprep.subr.bf16.mxu0 0
        %1258 = vmatpush1.bf16.msra.mxu0 0
        %1259 = vmatprep.subr.bf16.mxu0 0
        %1260 = vmatpush1.bf16.msra.mxu0 0
        %1261 = vmatprep.subr.bf16.mxu0 0
        %1262 = vmatpush1.bf16.msra.mxu0 0
        %1263 = vmatprep.subr.bf16.mxu0 0
        %1264 = vmatpush1.bf16.msra.mxu0 0
        %1265 = vmatprep.subr.bf16.mxu0 0
        %1266 = vmatpush1.bf16.msra.mxu0 0
        %1267 = vmatprep.subr.bf16.mxu0 0
        %1268 = vmatpush1.bf16.msra.mxu0 0
        %1269 = vmatprep.subr.bf16.mxu0 0
        %1270 = vmatpush1.bf16.msra.mxu0 0
        %1271 = vmatprep.subr.bf16.mxu0 0
        %1272 = vmatpush1.bf16.msra.mxu0 0
        %1273 = vmatprep.subr.bf16.mxu0 0
        %1274 = vmatpush1.bf16.msra.mxu0 0
        %1275 = vmatprep.subr.bf16.mxu0 0
        %1276 = vmatpush1.bf16.msra.mxu0 0
        %1277 = vmatprep.subr.bf16.mxu0 0
        %1278 = vmatpush1.bf16.msra.mxu0 0
        %1279 = vmatprep.subr.bf16.mxu0 0
        %1280 = vmatpush1.bf16.msra.mxu0 0
        %1281 = vmatprep.mubr.bf16.mxu0 0
        %1282 = vmatmul.mubr.bf16.gmra.mrb[0].mxu0 %v1244
        %v1283 = vpop.f32.mrb[0].mxu0
        %v1284 = vadd.f32 0.0, %v1283
        %v1285 = vpop.f32.mrb[0].mxu0
        %v1286 = vpop.f32.mrb[0].mxu0
        %v1287 = vpop.f32.mrb[0].mxu0
        %1288 = vdwg.mxu0
        %1290 = vrot.lane.b32.xlu0 %v1284, 16
        %v1291 = vpop.permute.xlu0 %1290
        %v1293 = vsel %vm1070, %v1174, %v1291
        %v1294 = vpack.c.bf16 %v1293, %v1293
        %v1295 = vld [vmem:[%s6] sm:$0xf]
        %v1296 = vld [vmem:[%s6 + $0x4] sm:$0xf]
        %v1297 = vld [vmem:[%s6 + $0x8] sm:$0xf]
        %v1298 = vld [vmem:[%s6 + $0xc] sm:$0xf]
        %v1299 = vlaneseq
        %v1300 = vshrl.u32 %v1299, 7
        %v1301 = vsub.s32 2, %v1300
        %v1302 = vrot.slane %v972, %v1301
        %v1307 = vunpack.c.l.b16 %v1295
        %v1308 = vunpack.c.l.b16 %v1296
        %v1309 = vunpack.c.l.b16 %v1297
        %v1310 = vunpack.c.l.b16 %v1298
        %v1311 = vpack.c.b16 %v1308, %v1307
        %v1312 = vpack.c.b16 %v1310, %v1309
        %v1316 = vsel %vm974, %v1294, 0
        %1318 = vmatprep.subr.bf16.mxu0 0
        %1319 = vmatpush1.bf16.msra.mxu0 %v1311
        %1320 = vmatprep.subr.bf16.mxu0 0
        %1321 = vmatpush1.bf16.msra.mxu0 %v1312
        %1322 = vmatprep.subr.bf16.mxu0 0
        %1323 = vmatpush1.bf16.msra.mxu0 0
        %1324 = vmatprep.subr.bf16.mxu0 0
        %1325 = vmatpush1.bf16.msra.mxu0 0
        %1326 = vmatprep.subr.bf16.mxu0 0
        %1327 = vmatpush1.bf16.msra.mxu0 0
        %1328 = vmatprep.subr.bf16.mxu0 0
        %1329 = vmatpush1.bf16.msra.mxu0 0
        %1330 = vmatprep.subr.bf16.mxu0 0
        %1331 = vmatpush1.bf16.msra.mxu0 0
        %1332 = vmatprep.subr.bf16.mxu0 0
        %1333 = vmatpush1.bf16.msra.mxu0 0
        %1334 = vmatprep.subr.bf16.mxu0 0
        %1335 = vmatpush1.bf16.msra.mxu0 0
        %1336 = vmatprep.subr.bf16.mxu0 0
        %1337 = vmatpush1.bf16.msra.mxu0 0
        %1338 = vmatprep.subr.bf16.mxu0 0
        %1339 = vmatpush1.bf16.msra.mxu0 0
        %1340 = vmatprep.subr.bf16.mxu0 0
        %1341 = vmatpush1.bf16.msra.mxu0 0
        %1342 = vmatprep.subr.bf16.mxu0 0
        %1343 = vmatpush1.bf16.msra.mxu0 0
        %1344 = vmatprep.subr.bf16.mxu0 0
        %1345 = vmatpush1.bf16.msra.mxu0 0
        %1346 = vmatprep.subr.bf16.mxu0 0
        %1347 = vmatpush1.bf16.msra.mxu0 0
        %1348 = vmatprep.subr.bf16.mxu0 0
        %1349 = vmatpush1.bf16.msra.mxu0 0
        %1350 = vmatprep.mubr.bf16.mxu0 0
        %1351 = vmatmul.mubr.bf16.gmra.mrb[0].mxu0 %v1316
        %v1352 = vpop.f32.mrb[0].mxu0
        %v1353 = vadd.f32 %v1302, %v1352
        %v1354 = vpop.f32.mrb[0].mxu0
        %v1355 = vpop.f32.mrb[0].mxu0
        %v1356 = vpop.f32.mrb[0].mxu0
        %1357 = vdwg.mxu0
        %v1358 = vadd.f32 %v963, %v1353
        %v1359 = vsel %vm974, %v1358, 0.0
        %1360 = vadd.xlane.f32.xlu0 %v1359
        %v1361 = vpop.xlane.xlu0 %1360
        %v1362 = vmul.f32 %v1361, %v978
        %v1363 = vsub.f32 %v1358, %v1362
        %v1364 = vmul.f32 %v1363, %v1363
        %v1365 = vsel %vm974, %v1364, 0.0
        %1366 = vadd.xlane.f32.xlu0 %v1365
        %v1367 = vpop.xlane.xlu0 %1366
        %v1368 = vmul.f32 %v1367, %v978
        %v1369 = vadd.f32 %v1368, 1e-06
        %v1370 = vrsqrt.pop %v1369
        %v1371 = vmul.f32 %v1363, %v1370
        %v1372 = vlaneseq
        %v1373 = vshrl.u32 %v1372, 7
        %v1374 = vsub.s32 3, %v1373
        %v1375 = vrot.slane %v972, %v1374
        %v1376 = vmul.f32 %v1371, %v1375
        %v1377 = vlaneseq
        %v1378 = vshrl.u32 %v1377, 7
        %v1379 = vsub.s32 4, %v1378
        %v1380 = vrot.slane %v972, %v1379
        %v1381 = vadd.f32 %v1376, %v1380
        %v1382 = vpack.c.bf16 %v1381, %v1381
        %v1383 = vld [vmem:[%s7] sm:$0xf]
        %v1384 = vld [vmem:[%s7 + $0x4] sm:$0xf]
        %v1385 = vld [vmem:[%s7 + $0x8] sm:$0xf]
        %v1386 = vld [vmem:[%s7 + $0xc] sm:$0xf]
        %v1387 = vld [vmem:[%s8] sm:$0x1]
        %v1389 = vlaneseq
        %v1390 = vshrl.u32 %v1389, 7
        %v1391 = vsub.s32 0, %v1390
        %v1392 = vrot.slane %v1387, %v1391
        %v1398 = vunpack.c.l.b16 %v1383
        %v1399 = vunpack.c.l.b16 %v1384
        %v1400 = vunpack.c.l.b16 %v1385
        %v1401 = vunpack.c.l.b16 %v1386
        %v1402 = vpack.c.b16 %v1399, %v1398
        %v1403 = vpack.c.b16 %v1401, %v1400
        %v1407 = vsel %vm974, %v1382, 0
        %1409 = vmatprep.subr.bf16.mxu0 0
        %1410 = vmatpush1.bf16.msra.mxu0 %v1402
        %1411 = vmatprep.subr.bf16.mxu0 0
        %1412 = vmatpush1.bf16.msra.mxu0 %v1403
        %1413 = vmatprep.subr.bf16.mxu0 0
        %1414 = vmatpush1.bf16.msra.mxu0 0
        %1415 = vmatprep.subr.bf16.mxu0 0
        %1416 = vmatpush1.bf16.msra.mxu0 0
        %1417 = vmatprep.subr.bf16.mxu0 0
        %1418 = vmatpush1.bf16.msra.mxu0 0
        %1419 = vmatprep.subr.bf16.mxu0 0
        %1420 = vmatpush1.bf16.msra.mxu0 0
        %1421 = vmatprep.subr.bf16.mxu0 0
        %1422 = vmatpush1.bf16.msra.mxu0 0
        %1423 = vmatprep.subr.bf16.mxu0 0
        %1424 = vmatpush1.bf16.msra.mxu0 0
        %1425 = vmatprep.subr.bf16.mxu0 0
        %1426 = vmatpush1.bf16.msra.mxu0 0
        %1427 = vmatprep.subr.bf16.mxu0 0
        %1428 = vmatpush1.bf16.msra.mxu0 0
        %1429 = vmatprep.subr.bf16.mxu0 0
        %1430 = vmatpush1.bf16.msra.mxu0 0
        %1431 = vmatprep.subr.bf16.mxu0 0
        %1432 = vmatpush1.bf16.msra.mxu0 0
        %1433 = vmatprep.subr.bf16.mxu0 0
        %1434 = vmatpush1.bf16.msra.mxu0 0
        %1435 = vmatprep.subr.bf16.mxu0 0
        %1436 = vmatpush1.bf16.msra.mxu0 0
        %1437 = vmatprep.subr.bf16.mxu0 0
        %1438 = vmatpush1.bf16.msra.mxu0 0
        %1439 = vmatprep.subr.bf16.mxu0 0
        %1440 = vmatpush1.bf16.msra.mxu0 0
        %1441 = vmatprep.mubr.bf16.mxu0 0
        %1442 = vmatmul.mubr.bf16.gmra.mrb[0].mxu0 %v1407
        %v1443 = vpop.f32.mrb[0].mxu0
        %v1444 = vadd.f32 %v1392, %v1443
        %v1445 = vpop.f32.mrb[0].mxu0
        %v1446 = vpop.f32.mrb[0].mxu0
        %v1447 = vpop.f32.mrb[0].mxu0
        %1448 = vdwg.mxu0
        %v1449 = vmul.f32 %v1444, %v1444
        %v1450 = vmul.f32 %v1444, %v1449
        %v1451 = vmul.f32 %v1450, 0.044715
        %v1452 = vadd.f32 %v1444, %v1451
        %v1453 = vmul.f32 %v1452, 0.7978846
        %v1454 = vtanh.pop %v1453
        %v1455 = vadd.f32 %v1454, 1.0
        %v1456 = vmul.f32 %v1455, 0.5
        %v1457 = vmul.f32 %v1444, %v1456
        %v1458 = vpack.c.bf16 %v1457, %v1457
        %v1459 = vld [vmem:[%s9] sm:$0xf]
        %v1460 = vld [vmem:[%s9 + $0x4] sm:$0xf]
        %v1461 = vld [vmem:[%s9 + $0x8] sm:$0xf]
        %v1462 = vld [vmem:[%s9 + $0xc] sm:$0xf]
        %v1463 = vld [vmem:[%s9 + $0x10] sm:$0xf]
        %v1464 = vld [vmem:[%s9 + $0x14] sm:$0xf]
        %v1465 = vld [vmem:[%s9 + $0x18] sm:$0xf]
        %v1466 = vld [vmem:[%s9 + $0x1c] sm:$0xf]
        %v1467 = vld [vmem:[%s9 + $0x20] sm:$0xf]
        %v1468 = vld [vmem:[%s9 + $0x24] sm:$0xf]
        %v1469 = vld [vmem:[%s9 + $0x28] sm:$0xf]
        %v1470 = vld [vmem:[%s9 + $0x2c] sm:$0xf]
        %v1471 = vld [vmem:[%s9 + $0x30] sm:$0xf]
        %v1472 = vld [vmem:[%s9 + $0x34] sm:$0xf]
        %v1473 = vld [vmem:[%s9 + $0x38] sm:$0xf]
        %v1474 = vld [vmem:[%s9 + $0x3c] sm:$0xf]
        %v1475 = vlaneseq
        %v1476 = vshrl.u32 %v1475, 7
        %v1477 = vsub.s32 5, %v1476
        %v1478 = vrot.slane %v972, %v1477
        %v1495 = vunpack.c.l.b16 %v1459
        %v1496 = vunpack.c.l.b16 %v1460
        %v1497 = vunpack.c.l.b16 %v1461
        %v1498 = vunpack.c.l.b16 %v1462
        %v1499 = vunpack.c.l.b16 %v1463
        %v1500 = vunpack.c.l.b16 %v1464
        %v1501 = vunpack.c.l.b16 %v1465
        %v1502 = vunpack.c.l.b16 %v1466
        %v1503 = vunpack.c.l.b16 %v1467
        %v1504 = vunpack.c.l.b16 %v1468
        %v1505 = vunpack.c.l.b16 %v1469
        %v1506 = vunpack.c.l.b16 %v1470
        %v1507 = vunpack.c.l.b16 %v1471
        %v1508 = vunpack.c.l.b16 %v1472
        %v1509 = vunpack.c.l.b16 %v1473
        %v1510 = vunpack.c.l.b16 %v1474
        %v1511 = vpack.c.b16 %v1496, %v1495
        %v1512 = vpack.c.b16 %v1498, %v1497
        %v1513 = vpack.c.b16 %v1500, %v1499
        %v1514 = vpack.c.b16 %v1502, %v1501
        %v1515 = vpack.c.b16 %v1504, %v1503
        %v1516 = vpack.c.b16 %v1506, %v1505
        %v1517 = vpack.c.b16 %v1508, %v1507
        %v1518 = vpack.c.b16 %v1510, %v1509
        %1527 = vmatprep.subr.bf16.mxu0 0
        %1528 = vmatpush1.bf16.msra.mxu0 %v1511
        %1529 = vmatprep.subr.bf16.mxu0 0
        %1530 = vmatpush1.bf16.msra.mxu0 %v1512
        %1531 = vmatprep.subr.bf16.mxu0 0
        %1532 = vmatpush1.bf16.msra.mxu0 %v1513
        %1533 = vmatprep.subr.bf16.mxu0 0
        %1534 = vmatpush1.bf16.msra.mxu0 %v1514
        %1535 = vmatprep.subr.bf16.mxu0 0
        %1536 = vmatpush1.bf16.msra.mxu0 %v1515
        %1537 = vmatprep.subr.bf16.mxu0 0
        %1538 = vmatpush1.bf16.msra.mxu0 %v1516
        %1539 = vmatprep.subr.bf16.mxu0 0
        %1540 = vmatpush1.bf16.msra.mxu0 %v1517
        %1541 = vmatprep.subr.bf16.mxu0 0
        %1542 = vmatpush1.bf16.msra.mxu0 %v1518
        %1543 = vmatprep.subr.bf16.mxu0 0
        %1544 = vmatpush1.bf16.msra.mxu0 0
        %1545 = vmatprep.subr.bf16.mxu0 0
        %1546 = vmatpush1.bf16.msra.mxu0 0
        %1547 = vmatprep.subr.bf16.mxu0 0
        %1548 = vmatpush1.bf16.msra.mxu0 0
        %1549 = vmatprep.subr.bf16.mxu0 0
        %1550 = vmatpush1.bf16.msra.mxu0 0
        %1551 = vmatprep.subr.bf16.mxu0 0
        %1552 = vmatpush1.bf16.msra.mxu0 0
        %1553 = vmatprep.subr.bf16.mxu0 0
        %1554 = vmatpush1.bf16.msra.mxu0 0
        %1555 = vmatprep.subr.bf16.mxu0 0
        %1556 = vmatpush1.bf16.msra.mxu0 0
        %1557 = vmatprep.subr.bf16.mxu0 0
        %1558 = vmatpush1.bf16.msra.mxu0 0
        %1559 = vmatprep.mubr.bf16.mxu0 0
        %1560 = vmatmul.mubr.bf16.gmra.mrb[0].mxu0 %v1458
        %v1561 = vpop.f32.mrb[0].mxu0
        %v1562 = vadd.f32 %v1478, %v1561
        %v1563 = vpop.f32.mrb[0].mxu0
        %v1564 = vpop.f32.mrb[0].mxu0
        %v1565 = vpop.f32.mrb[0].mxu0
        %1566 = vdwg.mxu0
        %v1567 = vadd.f32 %v1358, %v1562
        %v1568 = vsel %vm974, %v1567, 0.0
        %1569 = vadd.xlane.f32.xlu0 %v1568
        %v1570 = vpop.xlane.xlu0 %1569
        %v1571 = vmul.f32 %v1570, %v978
        %v1572 = vsub.f32 %v1567, %v1571
        %v1573 = vmul.f32 %v1572, %v1572
        %v1574 = vsel %vm974, %v1573, 0.0
        %1575 = vadd.xlane.f32.xlu0 %v1574
        %v1576 = vpop.xlane.xlu0 %1575
        %v1577 = vmul.f32 %v1576, %v978
        %v1578 = vadd.f32 %v1577, 1e-06
        %v1579 = vrsqrt.pop %v1578
        %v1580 = vmul.f32 %v1572, %v1579
        %v1581 = vlaneseq
        %v1582 = vshrl.u32 %v1581, 7
        %v1583 = vsub.s32 0, %v1582
        %v1584 = vrot.slane %v973, %v1583
        %v1585 = vmul.f32 %v1580, %v1584
        %v1586 = vlaneseq
        %v1587 = vshrl.u32 %v1586, 7
        %v1588 = vsub.s32 1, %v1587
        %v1589 = vrot.slane %v973, %v1588
        %v1590 = vadd.f32 %v1585, %v1589
        %v1591 = vpack.c.bf16 %v1590, %v1590
        %s1592 = scalar_lea.vmem %s4, 16
        %v1593 = vld [vmem:[%s1592] sm:$0xf]
        %v1594 = vld [vmem:[%s1592 + $0x4] sm:$0xf]
        %v1595 = vld [vmem:[%s1592 + $0x8] sm:$0xf]
        %v1596 = vld [vmem:[%s1592 + $0xc] sm:$0xf]
        %s1597 = scalar_lea.vmem %s5, 1
        %v1598 = vld [vmem:[%s1597] sm:$0x1]
        %v1600 = vlaneseq
        %v1601 = vshrl.u32 %v1600, 7
        %v1602 = vsub.s32 0, %v1601
        %v1603 = vrot.slane %v1598, %v1602
        %v1609 = vunpack.c.l.b16 %v1593
        %v1610 = vunpack.c.l.b16 %v1594
        %v1611 = vunpack.c.l.b16 %v1595
        %v1612 = vunpack.c.l.b16 %v1596
        %v1613 = vpack.c.b16 %v1610, %v1609
        %v1614 = vpack.c.b16 %v1612, %v1611
        %v1618 = vsel %vm974, %v1591, 0
        %1620 = vmatprep.subr.bf16.mxu0 0
        %1621 = vmatpush1.bf16.msra.mxu0 %v1613
        %1622 = vmatprep.subr.bf16.mxu0 0
        %1623 = vmatpush1.bf16.msra.mxu0 %v1614
        %1624 = vmatprep.subr.bf16.mxu0 0
        %1625 = vmatpush1.bf16.msra.mxu0 0
        %1626 = vmatprep.subr.bf16.mxu0 0
        %1627 = vmatpush1.bf16.msra.mxu0 0
        %1628 = vmatprep.subr.bf16.mxu0 0
        %1629 = vmatpush1.bf16.msra.mxu0 0
        %1630 = vmatprep.subr.bf16.mxu0 0
        %1631 = vmatpush1.bf16.msra.mxu0 0
        %1632 = vmatprep.subr.bf16.mxu0 0
        %1633 = vmatpush1.bf16.msra.mxu0 0
        %1634 = vmatprep.subr.bf16.mxu0 0
        %1635 = vmatpush1.bf16.msra.mxu0 0
        %1636 = vmatprep.subr.bf16.mxu0 0
        %1637 = vmatpush1.bf16.msra.mxu0 0
        %1638 = vmatprep.subr.bf16.mxu0 0
        %1639 = vmatpush1.bf16.msra.mxu0 0
        %1640 = vmatprep.subr.bf16.mxu0 0
        %1641 = vmatpush1.bf16.msra.mxu0 0
        %1642 = vmatprep.subr.bf16.mxu0 0
        %1643 = vmatpush1.bf16.msra.mxu0 0
        %1644 = vmatprep.subr.bf16.mxu0 0
        %1645 = vmatpush1.bf16.msra.mxu0 0
        %1646 = vmatprep.subr.bf16.mxu0 0
        %1647 = vmatpush1.bf16.msra.mxu0 0
        %1648 = vmatprep.subr.bf16.mxu0 0
        %1649 = vmatpush1.bf16.msra.mxu0 0
        %1650 = vmatprep.subr.bf16.mxu0 0
        %1651 = vmatpush1.bf16.msra.mxu0 0
        %1652 = vmatprep.mubr.bf16.mxu0 0
        %1653 = vmatmul.mubr.bf16.gmra.mrb[0].mxu0 %v1618
        %v1654 = vpop.f32.mrb[0].mxu0
        %v1655 = vadd.f32 %v1603, %v1654
        %v1656 = vpop.f32.mrb[0].mxu0
        %v1657 = vpop.f32.mrb[0].mxu0
        %v1658 = vpop.f32.mrb[0].mxu0
        %1659 = vdwg.mxu0
        %v1660 = vpack.c.bf16 %v1655, %v1655
        %1662 = vrot.lane.b32.xlu0 %v1660, 96
        %v1663 = vpop.permute.xlu0 %1662
        %v1665 = vsel %vm1070, %v1660, 0
        %v1668 = vsel %vm1070, %v1663, 0
        %1670 = vmatprep.subr.bf16.mxu0 0
        %1671 = vmatpush1.bf16.xpose.msra.mxu0 %v1668
        %1672 = vmatprep.subr.bf16.mxu0 0
        %1673 = vmatpush1.bf16.xpose.msra.mxu0 0
        %1674 = vmatprep.subr.bf16.mxu0 0
        %1675 = vmatpush1.bf16.xpose.msra.mxu0 0
        %1676 = vmatprep.subr.bf16.mxu0 0
        %1677 = vmatpush1.bf16.xpose.msra.mxu0 0
        %1678 = vmatprep.subr.bf16.mxu0 0
        %1679 = vmatpush1.bf16.xpose.msra.mxu0 0
        %1680 = vmatprep.subr.bf16.mxu0 0
        %1681 = vmatpush1.bf16.xpose.msra.mxu0 0
        %1682 = vmatprep.subr.bf16.mxu0 0
        %1683 = vmatpush1.bf16.xpose.msra.mxu0 0
        %1684 = vmatprep.subr.bf16.mxu0 0
        %1685 = vmatpush1.bf16.xpose.msra.mxu0 0
        %1686 = vmatprep.subr.bf16.mxu0 0
        %1687 = vmatpush1.bf16.xpose.msra.mxu0 0
        %1688 = vmatprep.subr.bf16.mxu0 0
        %1689 = vmatpush1.bf16.xpose.msra.mxu0 0
        %1690 = vmatprep.subr.bf16.mxu0 0
        %1691 = vmatpush1.bf16.xpose.msra.mxu0 0
        %1692 = vmatprep.subr.bf16.mxu0 0
        %1693 = vmatpush1.bf16.xpose.msra.mxu0 0
        %1694 = vmatprep.subr.bf16.mxu0 0
        %1695 = vmatpush1.bf16.xpose.msra.mxu0 0
        %1696 = vmatprep.subr.bf16.mxu0 0
        %1697 = vmatpush1.bf16.xpose.msra.mxu0 0
        %1698 = vmatprep.subr.bf16.mxu0 0
        %1699 = vmatpush1.bf16.xpose.msra.mxu0 0
        %1700 = vmatprep.subr.bf16.mxu0 0
        %1701 = vmatpush1.bf16.xpose.msra.mxu0 0
        %1702 = vmatprep.mubr.bf16.mxu0 0
        %1703 = vmatmul.mubr.bf16.gmra.mrb[0].mxu0 %v1665
        %v1704 = vpop.f32.mrb[0].mxu0
        %v1705 = vadd.f32 %v971, %v1704
        %v1706 = vpop.f32.mrb[0].mxu0
        %v1707 = vpop.f32.mrb[0].mxu0
        %v1708 = vpop.f32.mrb[0].mxu0
        %1709 = vdwg.mxu0
        %v1710 = vsel %vm1117, %v1705, -inf
        %1711 = vmax.xlane.f32.xlu0 %v1710
        %v1712 = vpop.xlane.xlu0 %1711
        %v1713 = vsub.f32 %v1705, %v1712
        %v1714 = vmul.f32 %v1713, 1.442695
        %v1715 = vpow.pop %v1714
        %v1716 = vsel %vm1117, %v1715, 0.0
        %1717 = vadd.xlane.f32.xlu0 %v1716
        %v1718 = vpop.xlane.xlu0 %1717
        %v1719 = vrcp.pop %v1718
        %v1720 = vmul.f32 %v1715, %v1719
        %v1721 = vpack.c.bf16 %v1720, %v1720
        %1722 = vrot.lane.b32.xlu0 %v1660, 64
        %v1723 = vpop.permute.xlu0 %1722
        %v1725 = vsel %vm1117, %v1721, 0
        %v1728 = vsel %vm1135, %v1723, 0
        %1730 = vmatprep.subr.bf16.mxu0 0
        %1731 = vmatpush1.bf16.msra.mxu0 %v1728
        %1732 = vmatprep.subr.bf16.mxu0 0
        %1733 = vmatpush1.bf16.msra.mxu0 0
        %1734 = vmatprep.subr.bf16.mxu0 0
        %1735 = vmatpush1.bf16.msra.mxu0 0
        %1736 = vmatprep.subr.bf16.mxu0 0
        %1737 = vmatpush1.bf16.msra.mxu0 0
        %1738 = vmatprep.subr.bf16.mxu0 0
        %1739 = vmatpush1.bf16.msra.mxu0 0
        %1740 = vmatprep.subr.bf16.mxu0 0
        %1741 = vmatpush1.bf16.msra.mxu0 0
        %1742 = vmatprep.subr.bf16.mxu0 0
        %1743 = vmatpush1.bf16.msra.mxu0 0
        %1744 = vmatprep.subr.bf16.mxu0 0
        %1745 = vmatpush1.bf16.msra.mxu0 0
        %1746 = vmatprep.subr.bf16.mxu0 0
        %1747 = vmatpush1.bf16.msra.mxu0 0
        %1748 = vmatprep.subr.bf16.mxu0 0
        %1749 = vmatpush1.bf16.msra.mxu0 0
        %1750 = vmatprep.subr.bf16.mxu0 0
        %1751 = vmatpush1.bf16.msra.mxu0 0
        %1752 = vmatprep.subr.bf16.mxu0 0
        %1753 = vmatpush1.bf16.msra.mxu0 0
        %1754 = vmatprep.subr.bf16.mxu0 0
        %1755 = vmatpush1.bf16.msra.mxu0 0
        %1756 = vmatprep.subr.bf16.mxu0 0
        %1757 = vmatpush1.bf16.msra.mxu0 0
        %1758 = vmatprep.subr.bf16.mxu0 0
        %1759 = vmatpush1.bf16.msra.mxu0 0
        %1760 = vmatprep.subr.bf16.mxu0 0
        %1761 = vmatpush1.bf16.msra.mxu0 0
        %1762 = vmatprep.mubr.bf16.mxu0 0
        %1763 = vmatmul.mubr.bf16.gmra.mrb[0].mxu0 %v1725
        %v1764 = vpop.f32.mrb[0].mxu0
        %v1765 = vadd.f32 0.0, %v1764
        %v1766 = vpop.f32.mrb[0].mxu0
        %v1767 = vpop.f32.mrb[0].mxu0
        %v1768 = vpop.f32.mrb[0].mxu0
        %1769 = vdwg.mxu0
        %1770 = vrot.lane.b32.xlu0 %v1660, 112
        %v1771 = vpop.permute.xlu0 %1770
        %1772 = vrot.lane.b32.xlu0 %v1660, 80
        %v1773 = vpop.permute.xlu0 %1772
        %v1775 = vsel %vm1070, %v1771, 0
        %v1778 = vsel %vm1070, %v1773, 0
        %1780 = vmatprep.subr.bf16.mxu0 0
        %1781 = vmatpush1.bf16.xpose.msra.mxu0 %v1778
        %1782 = vmatprep.subr.bf16.mxu0 0
        %1783 = vmatpush1.bf16.xpose.msra.mxu0 0
        %1784 = vmatprep.subr.bf16.mxu0 0
        %1785 = vmatpush1.bf16.xpose.msra.mxu0 0
        %1786 = vmatprep.subr.bf16.mxu0 0
        %1787 = vmatpush1.bf16.xpose.msra.mxu0 0
        %1788 = vmatprep.subr.bf16.mxu0 0
        %1789 = vmatpush1.bf16.xpose.msra.mxu0 0
        %1790 = vmatprep.subr.bf16.mxu0 0
        %1791 = vmatpush1.bf16.xpose.msra.mxu0 0
        %1792 = vmatprep.subr.bf16.mxu0 0
        %1793 = vmatpush1.bf16.xpose.msra.mxu0 0
        %1794 = vmatprep.subr.bf16.mxu0 0
        %1795 = vmatpush1.bf16.xpose.msra.mxu0 0
        %1796 = vmatprep.subr.bf16.mxu0 0
        %1797 = vmatpush1.bf16.xpose.msra.mxu0 0
        %1798 = vmatprep.subr.bf16.mxu0 0
        %1799 = vmatpush1.bf16.xpose.msra.mxu0 0
        %1800 = vmatprep.subr.bf16.mxu0 0
        %1801 = vmatpush1.bf16.xpose.msra.mxu0 0
        %1802 = vmatprep.subr.bf16.mxu0 0
        %1803 = vmatpush1.bf16.xpose.msra.mxu0 0
        %1804 = vmatprep.subr.bf16.mxu0 0
        %1805 = vmatpush1.bf16.xpose.msra.mxu0 0
        %1806 = vmatprep.subr.bf16.mxu0 0
        %1807 = vmatpush1.bf16.xpose.msra.mxu0 0
        %1808 = vmatprep.subr.bf16.mxu0 0
        %1809 = vmatpush1.bf16.xpose.msra.mxu0 0
        %1810 = vmatprep.subr.bf16.mxu0 0
        %1811 = vmatpush1.bf16.xpose.msra.mxu0 0
        %1812 = vmatprep.mubr.bf16.mxu0 0
        %1813 = vmatmul.mubr.bf16.gmra.mrb[0].mxu0 %v1775
        %v1814 = vpop.f32.mrb[0].mxu0
        %v1815 = vadd.f32 %v971, %v1814
        %v1816 = vpop.f32.mrb[0].mxu0
        %v1817 = vpop.f32.mrb[0].mxu0
        %v1818 = vpop.f32.mrb[0].mxu0
        %1819 = vdwg.mxu0
        %v1820 = vsel %vm1117, %v1815, -inf
        %1821 = vmax.xlane.f32.xlu0 %v1820
        %v1822 = vpop.xlane.xlu0 %1821
        %v1823 = vsub.f32 %v1815, %v1822
        %v1824 = vmul.f32 %v1823, 1.442695
        %v1825 = vpow.pop %v1824
        %v1826 = vsel %vm1117, %v1825, 0.0
        %1827 = vadd.xlane.f32.xlu0 %v1826
        %v1828 = vpop.xlane.xlu0 %1827
        %v1829 = vrcp.pop %v1828
        %v1830 = vmul.f32 %v1825, %v1829
        %v1831 = vpack.c.bf16 %v1830, %v1830
        %1832 = vrot.lane.b32.xlu0 %v1660, 48
        %v1833 = vpop.permute.xlu0 %1832
        %v1835 = vsel %vm1117, %v1831, 0
        %v1838 = vsel %vm1135, %v1833, 0
        %1840 = vmatprep.subr.bf16.mxu0 0
        %1841 = vmatpush1.bf16.msra.mxu0 %v1838
        %1842 = vmatprep.subr.bf16.mxu0 0
        %1843 = vmatpush1.bf16.msra.mxu0 0
        %1844 = vmatprep.subr.bf16.mxu0 0
        %1845 = vmatpush1.bf16.msra.mxu0 0
        %1846 = vmatprep.subr.bf16.mxu0 0
        %1847 = vmatpush1.bf16.msra.mxu0 0
        %1848 = vmatprep.subr.bf16.mxu0 0
        %1849 = vmatpush1.bf16.msra.mxu0 0
        %1850 = vmatprep.subr.bf16.mxu0 0
        %1851 = vmatpush1.bf16.msra.mxu0 0
        %1852 = vmatprep.subr.bf16.mxu0 0
        %1853 = vmatpush1.bf16.msra.mxu0 0
        %1854 = vmatprep.subr.bf16.mxu0 0
        %1855 = vmatpush1.bf16.msra.mxu0 0
        %1856 = vmatprep.subr.bf16.mxu0 0
        %1857 = vmatpush1.bf16.msra.mxu0 0
        %1858 = vmatprep.subr.bf16.mxu0 0
        %1859 = vmatpush1.bf16.msra.mxu0 0
        %1860 = vmatprep.subr.bf16.mxu0 0
        %1861 = vmatpush1.bf16.msra.mxu0 0
        %1862 = vmatprep.subr.bf16.mxu0 0
        %1863 = vmatpush1.bf16.msra.mxu0 0
        %1864 = vmatprep.subr.bf16.mxu0 0
        %1865 = vmatpush1.bf16.msra.mxu0 0
        %1866 = vmatprep.subr.bf16.mxu0 0
        %1867 = vmatpush1.bf16.msra.mxu0 0
        %1868 = vmatprep.subr.bf16.mxu0 0
        %1869 = vmatpush1.bf16.msra.mxu0 0
        %1870 = vmatprep.subr.bf16.mxu0 0
        %1871 = vmatpush1.bf16.msra.mxu0 0
        %1872 = vmatprep.mubr.bf16.mxu0 0
        %1873 = vmatmul.mubr.bf16.gmra.mrb[0].mxu0 %v1835
        %v1874 = vpop.f32.mrb[0].mxu0
        %v1875 = vadd.f32 0.0, %v1874
        %v1876 = vpop.f32.mrb[0].mxu0
        %v1877 = vpop.f32.mrb[0].mxu0
        %v1878 = vpop.f32.mrb[0].mxu0
        %1879 = vdwg.mxu0
        %1881 = vrot.lane.b32.xlu0 %v1875, 16
        %v1882 = vpop.permute.xlu0 %1881
        %v1884 = vsel %vm1070, %v1765, %v1882
        %v1885 = vpack.c.bf16 %v1884, %v1884
        %s1886 = scalar_lea.vmem %s6, 16
        %v1887 = vld [vmem:[%s1886] sm:$0xf]
        %v1888 = vld [vmem:[%s1886 + $0x4] sm:$0xf]
        %v1889 = vld [vmem:[%s1886 + $0x8] sm:$0xf]
        %v1890 = vld [vmem:[%s1886 + $0xc] sm:$0xf]
        %v1891 = vlaneseq
        %v1892 = vshrl.u32 %v1891, 7
        %v1893 = vsub.s32 2, %v1892
        %v1894 = vrot.slane %v973, %v1893
        %v1899 = vunpack.c.l.b16 %v1887
        %v1900 = vunpack.c.l.b16 %v1888
        %v1901 = vunpack.c.l.b16 %v1889
        %v1902 = vunpack.c.l.b16 %v1890
        %v1903 = vpack.c.b16 %v1900, %v1899
        %v1904 = vpack.c.b16 %v1902, %v1901
        %v1908 = vsel %vm974, %v1885, 0
        %1910 = vmatprep.subr.bf16.mxu0 0
        %1911 = vmatpush1.bf16.msra.mxu0 %v1903
        %1912 = vmatprep.subr.bf16.mxu0 0
        %1913 = vmatpush1.bf16.msra.mxu0 %v1904
        %1914 = vmatprep.subr.bf16.mxu0 0
        %1915 = vmatpush1.bf16.msra.mxu0 0
        %1916 = vmatprep.subr.bf16.mxu0 0
        %1917 = vmatpush1.bf16.msra.mxu0 0
        %1918 = vmatprep.subr.bf16.mxu0 0
        %1919 = vmatpush1.bf16.msra.mxu0 0
        %1920 = vmatprep.subr.bf16.mxu0 0
        %1921 = vmatpush1.bf16.msra.mxu0 0
        %1922 = vmatprep.subr.bf16.mxu0 0
        %1923 = vmatpush1.bf16.msra.mxu0 0
        %1924 = vmatprep.subr.bf16.mxu0 0
        %1925 = vmatpush1.bf16.msra.mxu0 0
        %1926 = vmatprep.subr.bf16.mxu0 0
        %1927 = vmatpush1.bf16.msra.mxu0 0
        %1928 = vmatprep.subr.bf16.mxu0 0
        %1929 = vmatpush1.bf16.msra.mxu0 0
        %1930 = vmatprep.subr.bf16.mxu0 0
        %1931 = vmatpush1.bf16.msra.mxu0 0
        %1932 = vmatprep.subr.bf16.mxu0 0
        %1933 = vmatpush1.bf16.msra.mxu0 0
        %1934 = vmatprep.subr.bf16.mxu0 0
        %1935 = vmatpush1.bf16.msra.mxu0 0
        %1936 = vmatprep.subr.bf16.mxu0 0
        %1937 = vmatpush1.bf16.msra.mxu0 0
        %1938 = vmatprep.subr.bf16.mxu0 0
        %1939 = vmatpush1.bf16.msra.mxu0 0
        %1940 = vmatprep.subr.bf16.mxu0 0
        %1941 = vmatpush1.bf16.msra.mxu0 0
        %1942 = vmatprep.mubr.bf16.mxu0 0
        %1943 = vmatmul.mubr.bf16.gmra.mrb[0].mxu0 %v1908
        %v1944 = vpop.f32.mrb[0].mxu0
        %v1945 = vadd.f32 %v1894, %v1944
        %v1946 = vpop.f32.mrb[0].mxu0
        %v1947 = vpop.f32.mrb[0].mxu0
        %v1948 = vpop.f32.mrb[0].mxu0
        %1949 = vdwg.mxu0
        %v1950 = vadd.f32 %v1567, %v1945
        %v1951 = vsel %vm974, %v1950, 0.0
        %1952 = vadd.xlane.f32.xlu0 %v1951
        %v1953 = vpop.xlane.xlu0 %1952
        %v1954 = vmul.f32 %v1953, %v978
        %v1955 = vsub.f32 %v1950, %v1954
        %v1956 = vmul.f32 %v1955, %v1955
        %v1957 = vsel %vm974, %v1956, 0.0
        %1958 = vadd.xlane.f32.xlu0 %v1957
        %v1959 = vpop.xlane.xlu0 %1958
        %v1960 = vmul.f32 %v1959, %v978
        %v1961 = vadd.f32 %v1960, 1e-06
        %v1962 = vrsqrt.pop %v1961
        %v1963 = vmul.f32 %v1955, %v1962
        %v1964 = vlaneseq
        %v1965 = vshrl.u32 %v1964, 7
        %v1966 = vsub.s32 3, %v1965
        %v1967 = vrot.slane %v973, %v1966
        %v1968 = vmul.f32 %v1963, %v1967
        %v1969 = vlaneseq
        %v1970 = vshrl.u32 %v1969, 7
        %v1971 = vsub.s32 4, %v1970
        %v1972 = vrot.slane %v973, %v1971
        %v1973 = vadd.f32 %v1968, %v1972
        %v1974 = vpack.c.bf16 %v1973, %v1973
        %s1975 = scalar_lea.vmem %s7, 16
        %v1976 = vld [vmem:[%s1975] sm:$0xf]
        %v1977 = vld [vmem:[%s1975 + $0x4] sm:$0xf]
        %v1978 = vld [vmem:[%s1975 + $0x8] sm:$0xf]
        %v1979 = vld [vmem:[%s1975 + $0xc] sm:$0xf]
        %s1980 = scalar_lea.vmem %s8, 1
        %v1981 = vld [vmem:[%s1980] sm:$0x1]
        %v1983 = vlaneseq
        %v1984 = vshrl.u32 %v1983, 7
        %v1985 = vsub.s32 0, %v1984
        %v1986 = vrot.slane %v1981, %v1985
        %v1992 = vunpack.c.l.b16 %v1976
        %v1993 = vunpack.c.l.b16 %v1977
        %v1994 = vunpack.c.l.b16 %v1978
        %v1995 = vunpack.c.l.b16 %v1979
        %v1996 = vpack.c.b16 %v1993, %v1992
        %v1997 = vpack.c.b16 %v1995, %v1994
        %v2001 = vsel %vm974, %v1974, 0
        %2003 = vmatprep.subr.bf16.mxu0 0
        %2004 = vmatpush1.bf16.msra.mxu0 %v1996
        %2005 = vmatprep.subr.bf16.mxu0 0
        %2006 = vmatpush1.bf16.msra.mxu0 %v1997
        %2007 = vmatprep.subr.bf16.mxu0 0
        %2008 = vmatpush1.bf16.msra.mxu0 0
        %2009 = vmatprep.subr.bf16.mxu0 0
        %2010 = vmatpush1.bf16.msra.mxu0 0
        %2011 = vmatprep.subr.bf16.mxu0 0
        %2012 = vmatpush1.bf16.msra.mxu0 0
        %2013 = vmatprep.subr.bf16.mxu0 0
        %2014 = vmatpush1.bf16.msra.mxu0 0
        %2015 = vmatprep.subr.bf16.mxu0 0
        %2016 = vmatpush1.bf16.msra.mxu0 0
        %2017 = vmatprep.subr.bf16.mxu0 0
        %2018 = vmatpush1.bf16.msra.mxu0 0
        %2019 = vmatprep.subr.bf16.mxu0 0
        %2020 = vmatpush1.bf16.msra.mxu0 0
        %2021 = vmatprep.subr.bf16.mxu0 0
        %2022 = vmatpush1.bf16.msra.mxu0 0
        %2023 = vmatprep.subr.bf16.mxu0 0
        %2024 = vmatpush1.bf16.msra.mxu0 0
        %2025 = vmatprep.subr.bf16.mxu0 0
        %2026 = vmatpush1.bf16.msra.mxu0 0
        %2027 = vmatprep.subr.bf16.mxu0 0
        %2028 = vmatpush1.bf16.msra.mxu0 0
        %2029 = vmatprep.subr.bf16.mxu0 0
        %2030 = vmatpush1.bf16.msra.mxu0 0
        %2031 = vmatprep.subr.bf16.mxu0 0
        %2032 = vmatpush1.bf16.msra.mxu0 0
        %2033 = vmatprep.subr.bf16.mxu0 0
        %2034 = vmatpush1.bf16.msra.mxu0 0
        %2035 = vmatprep.mubr.bf16.mxu0 0
        %2036 = vmatmul.mubr.bf16.gmra.mrb[0].mxu0 %v2001
        %v2037 = vpop.f32.mrb[0].mxu0
        %v2038 = vadd.f32 %v1986, %v2037
        %v2039 = vpop.f32.mrb[0].mxu0
        %v2040 = vpop.f32.mrb[0].mxu0
        %v2041 = vpop.f32.mrb[0].mxu0
        %2042 = vdwg.mxu0
        %v2043 = vmul.f32 %v2038, %v2038
        %v2044 = vmul.f32 %v2038, %v2043
        %v2045 = vmul.f32 %v2044, 0.044715
        %v2046 = vadd.f32 %v2038, %v2045
        %v2047 = vmul.f32 %v2046, 0.7978846
        %v2048 = vtanh.pop %v2047
        %v2049 = vadd.f32 %v2048, 1.0
        %v2050 = vmul.f32 %v2049, 0.5
        %v2051 = vmul.f32 %v2038, %v2050
        %v2052 = vpack.c.bf16 %v2051, %v2051
        %s2053 = scalar_lea.vmem %s9, 64
        %v2054 = vld [vmem:[%s2053] sm:$0xf]
        %v2055 = vld [vmem:[%s2053 + $0x4] sm:$0xf]
        %v2056 = vld [vmem:[%s2053 + $0x8] sm:$0xf]
        %v2057 = vld [vmem:[%s2053 + $0xc] sm:$0xf]
        %v2058 = vld [vmem:[%s2053 + $0x10] sm:$0xf]
        %v2059 = vld [vmem:[%s2053 + $0x14] sm:$0xf]
        %v2060 = vld [vmem:[%s2053 + $0x18] sm:$0xf]
        %v2061 = vld [vmem:[%s2053 + $0x1c] sm:$0xf]
        %v2062 = vld [vmem:[%s2053 + $0x20] sm:$0xf]
        %v2063 = vld [vmem:[%s2053 + $0x24] sm:$0xf]
        %v2064 = vld [vmem:[%s2053 + $0x28] sm:$0xf]
        %v2065 = vld [vmem:[%s2053 + $0x2c] sm:$0xf]
        %v2066 = vld [vmem:[%s2053 + $0x30] sm:$0xf]
        %v2067 = vld [vmem:[%s2053 + $0x34] sm:$0xf]
        %v2068 = vld [vmem:[%s2053 + $0x38] sm:$0xf]
        %v2069 = vld [vmem:[%s2053 + $0x3c] sm:$0xf]
        %v2070 = vlaneseq
        %v2071 = vshrl.u32 %v2070, 7
        %v2072 = vsub.s32 5, %v2071
        %v2073 = vrot.slane %v973, %v2072
        %v2090 = vunpack.c.l.b16 %v2054
        %v2091 = vunpack.c.l.b16 %v2055
        %v2092 = vunpack.c.l.b16 %v2056
        %v2093 = vunpack.c.l.b16 %v2057
        %v2094 = vunpack.c.l.b16 %v2058
        %v2095 = vunpack.c.l.b16 %v2059
        %v2096 = vunpack.c.l.b16 %v2060
        %v2097 = vunpack.c.l.b16 %v2061
        %v2098 = vunpack.c.l.b16 %v2062
        %v2099 = vunpack.c.l.b16 %v2063
        %v2100 = vunpack.c.l.b16 %v2064
        %v2101 = vunpack.c.l.b16 %v2065
        %v2102 = vunpack.c.l.b16 %v2066
        %v2103 = vunpack.c.l.b16 %v2067
        %v2104 = vunpack.c.l.b16 %v2068
        %v2105 = vunpack.c.l.b16 %v2069
        %v2106 = vpack.c.b16 %v2091, %v2090
        %v2107 = vpack.c.b16 %v2093, %v2092
        %v2108 = vpack.c.b16 %v2095, %v2094
        %v2109 = vpack.c.b16 %v2097, %v2096
        %v2110 = vpack.c.b16 %v2099, %v2098
        %v2111 = vpack.c.b16 %v2101, %v2100
        %v2112 = vpack.c.b16 %v2103, %v2102
        %v2113 = vpack.c.b16 %v2105, %v2104
        %2122 = vmatprep.subr.bf16.mxu0 0
        %2123 = vmatpush1.bf16.msra.mxu0 %v2106
        %2124 = vmatprep.subr.bf16.mxu0 0
        %2125 = vmatpush1.bf16.msra.mxu0 %v2107
        %2126 = vmatprep.subr.bf16.mxu0 0
        %2127 = vmatpush1.bf16.msra.mxu0 %v2108
        %2128 = vmatprep.subr.bf16.mxu0 0
        %2129 = vmatpush1.bf16.msra.mxu0 %v2109
        %2130 = vmatprep.subr.bf16.mxu0 0
        %2131 = vmatpush1.bf16.msra.mxu0 %v2110
        %2132 = vmatprep.subr.bf16.mxu0 0
        %2133 = vmatpush1.bf16.msra.mxu0 %v2111
        %2134 = vmatprep.subr.bf16.mxu0 0
        %2135 = vmatpush1.bf16.msra.mxu0 %v2112
        %2136 = vmatprep.subr.bf16.mxu0 0
        %2137 = vmatpush1.bf16.msra.mxu0 %v2113
        %2138 = vmatprep.subr.bf16.mxu0 0
        %2139 = vmatpush1.bf16.msra.mxu0 0
        %2140 = vmatprep.subr.bf16.mxu0 0
        %2141 = vmatpush1.bf16.msra.mxu0 0
        %2142 = vmatprep.subr.bf16.mxu0 0
        %2143 = vmatpush1.bf16.msra.mxu0 0
        %2144 = vmatprep.subr.bf16.mxu0 0
        %2145 = vmatpush1.bf16.msra.mxu0 0
        %2146 = vmatprep.subr.bf16.mxu0 0
        %2147 = vmatpush1.bf16.msra.mxu0 0
        %2148 = vmatprep.subr.bf16.mxu0 0
        %2149 = vmatpush1.bf16.msra.mxu0 0
        %2150 = vmatprep.subr.bf16.mxu0 0
        %2151 = vmatpush1.bf16.msra.mxu0 0
        %2152 = vmatprep.subr.bf16.mxu0 0
        %2153 = vmatpush1.bf16.msra.mxu0 0
        %2154 = vmatprep.mubr.bf16.mxu0 0
        %2155 = vmatmul.mubr.bf16.gmra.mrb[0].mxu0 %v2052
        %v2156 = vpop.f32.mrb[0].mxu0
        %v2157 = vadd.f32 %v2073, %v2156
        %v2158 = vpop.f32.mrb[0].mxu0
        %v2159 = vpop.f32.mrb[0].mxu0
        %v2160 = vpop.f32.mrb[0].mxu0
        %2161 = vdwg.mxu0
        %v2162 = vadd.f32 %v1950, %v2157
        %v2163 = vld [vmem:[%s10] sm:$0x1]
        %v2164 = vld [vmem:[%s10 + $0x1] sm:$0x1]
        %vm2165 = vcmask 253952
        %v2166 = vsel %vm2165, %v2162, 0.0
        %2167 = vadd.xlane.f32.xlu0 %v2166
        %v2168 = vpop.xlane.xlu0 %2167
        %v2169 = vmul.f32 %v2168, %v978
        %v2170 = vsub.f32 %v2162, %v2169
        %v2171 = vmul.f32 %v2170, %v2170
        %v2172 = vsel %vm2165, %v2171, 0.0
        %2173 = vadd.xlane.f32.xlu0 %v2172
        %v2174 = vpop.xlane.xlu0 %2173
        %v2175 = vmul.f32 %v2174, %v978
        %v2176 = vadd.f32 %v2175, 1e-06
        %v2177 = vrsqrt.pop %v2176
        %v2178 = vmul.f32 %v2170, %v2177
        %v2179 = vmul.f32 %v2178, %v2163
        %v2180 = vadd.f32 %v2179, %v2164
        %v2181 = vpack.c.bf16 %v2180, %v2180
        %v2182 = vld [vmem:[%s11] sm:$0xf]
        %v2183 = vld [vmem:[%s11 + $0x4] sm:$0xf]
        %v2184 = vld [vmem:[%s11 + $0x8] sm:$0xf]
        %v2185 = vld [vmem:[%s11 + $0xc] sm:$0xf]
        %v2186 = vld [vmem:[%s12] sm:$0x1]
        %v2191 = vunpack.c.l.b16 %v2182
        %v2192 = vunpack.c.l.b16 %v2183
        %v2193 = vunpack.c.l.b16 %v2184
        %v2194 = vunpack.c.l.b16 %v2185
        %v2195 = vpack.c.b16 %v2192, %v2191
        %v2196 = vpack.c.b16 %v2194, %v2193
        %v2200 = vsel %vm974, %v2181, 0
        %2202 = vmatprep.subr.bf16.mxu0 0
        %2203 = vmatpush1.bf16.msra.mxu0 %v2195
        %2204 = vmatprep.subr.bf16.mxu0 0
        %2205 = vmatpush1.bf16.msra.mxu0 %v2196
        %2206 = vmatprep.subr.bf16.mxu0 0
        %2207 = vmatpush1.bf16.msra.mxu0 0
        %2208 = vmatprep.subr.bf16.mxu0 0
        %2209 = vmatpush1.bf16.msra.mxu0 0
        %2210 = vmatprep.subr.bf16.mxu0 0
        %2211 = vmatpush1.bf16.msra.mxu0 0
        %2212 = vmatprep.subr.bf16.mxu0 0
        %2213 = vmatpush1.bf16.msra.mxu0 0
        %2214 = vmatprep.subr.bf16.mxu0 0
        %2215 = vmatpush1.bf16.msra.mxu0 0
        %2216 = vmatprep.subr.bf16.mxu0 0
        %2217 = vmatpush1.bf16.msra.mxu0 0
        %2218 = vmatprep.subr.bf16.mxu0 0
        %2219 = vmatpush1.bf16.msra.mxu0 0
        %2220 = vmatprep.subr.bf16.mxu0 0
        %2221 = vmatpush1.bf16.msra.mxu0 0
        %2222 = vmatprep.subr.bf16.mxu0 0
        %2223 = vmatpush1.bf16.msra.mxu0 0
        %2224 = vmatprep.subr.bf16.mxu0 0
        %2225 = vmatpush1.bf16.msra.mxu0 0
        %2226 = vmatprep.subr.bf16.mxu0 0
        %2227 = vmatpush1.bf16.msra.mxu0 0
        %2228 = vmatprep.subr.bf16.mxu0 0
        %2229 = vmatpush1.bf16.msra.mxu0 0
        %2230 = vmatprep.subr.bf16.mxu0 0
        %2231 = vmatpush1.bf16.msra.mxu0 0
        %2232 = vmatprep.subr.bf16.mxu0 0
        %2233 = vmatpush1.bf16.msra.mxu0 0
        %2234 = vmatprep.mubr.bf16.mxu0 0
        %2235 = vmatmul.mubr.bf16.gmra.mrb[0].mxu0 %v2200
        %v2236 = vpop.f32.mrb[0].mxu0
        %v2237 = vadd.f32 %v2186, %v2236
        %v2238 = vpop.f32.mrb[0].mxu0
        %v2239 = vpop.f32.mrb[0].mxu0
        %v2240 = vpop.f32.mrb[0].mxu0
        %2241 = vdwg.mxu0
        %vm2242 = vcmask 385024
        %2243 = vst.msk [vmem:[%s432] sm:$0x1] %vm2242, %v2237
        %s2244 = sand.u32 %s313, 1
        %s2245 = scalar_lea.sflag [#allocation3], %s2244
        %s2246 = sand.u32 %s313, 1
        %s2247 = scalar_lea.vmem [#allocation2], %s2246
        // Predicated region
        $region73: #{image_encoder_forward.1} parent=71 // pred_check
          %p2248 = pneg %p323
        $region74: #{image_encoder_forward.1} parent=71 // pred_check_branch
          %2250 = sbr.rel (%p2248) target = $region76
        $region75: #{image_encoder_forward.1} parent=71 // pred_region
          %s2252 = ssub.s32 16, 16
          %2253 = vsyncadd %s2245, %s2252
          %s2254 = smul.addr %s27, 16
          %s2255 = scalar_lea.hbm %s13, %s2254
          %s2257 = sshll.u32 %s2247, 4
          %s2258 = int_to_ptr.vmem [resolvable:$true] %s2257
          %2260 = dma.vmem_to_hbm [thread:$0]  %s2258, 16, %s2255, %s2245
        $region76: #{image_encoder_forward.1} parent=71 // pred_fallthru
          _
      $region72: #{image_encoder_forward.1} parent=5 // pred_fallthru
        _
      %p2261 = scmp.le.s32.totalorder 2, %s22
      // Predicated region
      $region77: #{image_encoder_forward.1} parent=5 // pred_check
        %p2262 = pneg %p2261
      $region78: #{image_encoder_forward.1} parent=5 // pred_check_branch
        %2264 = sbr.rel (%p2262) target = $region80
      $region79: #{image_encoder_forward.1} parent=5 // pred_region
        %s2265 = ssub.s32 %s22, 2
        // Predicated region
        $region81: #{image_encoder_forward.1} parent=79 // pred_check
          %p2266 = pneg %p329
        $region82: #{image_encoder_forward.1} parent=79 // pred_check_branch
          %2268 = sbr.rel (%p2266) target = $region84
        $region83: #{image_encoder_forward.1} parent=79 // pred_region
          %s2269 = sand.u32 %s314, 1
          %s2270 = scalar_lea.sflag [#allocation3], %s2269
          %s2271 = sand.u32 %s314, 1
          %s2272 = scalar_lea.vmem [#allocation2], %s2271
          %2273 = dma.done %s2270, 16
        $region84: #{image_encoder_forward.1} parent=79 // pred_fallthru
          _
      $region80: #{image_encoder_forward.1} parent=5 // pred_fallthru
        _
    $region6: #{image_encoder_forward.1} parent=1 // loop_footer
      %s26 = sadd.s32 1, %s22
    $region7: #{image_encoder_forward.1} parent=1 // loop_footer_branch
      %21 = sbr.rel target = $region3
    $region8: #{image_encoder_forward.1} parent=1 // loop_exit
      _
    %2274 = vsyncpa [#allocation3], 1
    %s2275 = scalar_lea.sflag [#allocation3], 1
    %2276 = vsyncpa %s2275, 1

</llo_original>
